<compile_context>
chip_gen: v7x
topology: tpu7x:2x2x1
jax: 0.10.0
libtpu: 0.0.40
codegen_flags: <defaults>
</compile_context>

<pallas_src>
import functools

import jax
import jax.numpy as jnp
from jax.experimental import pallas as pl
from jax.experimental.pallas import tpu as pltpu

# ---- model dimensions (small, consistent with the forward pass) -------------
B = 2            # batch
S = 8            # sequence length
H = 32           # hidden_size
NH = 2           # num attention heads
HD = H // NH     # head dim
FF = 64          # FFN intermediate
NUM_LABELS = 2
VOCAB = 50
R = B * S        # batch folded into rows
LN_EPS = 1e-12


def _layer_norm(x, gamma, beta):
    mean = jnp.mean(x, axis=-1, keepdims=True)
    var = jnp.mean((x - mean) ** 2, axis=-1, keepdims=True)
    return (x - mean) * jax.lax.rsqrt(var + LN_EPS) * gamma + beta


# -----------------------------------------------------------------------------
# Single fused kernel: encoder layer + pooling + head + softmax (one grid step).
# -----------------------------------------------------------------------------
def fused_kernel(x_ref, smask_ref, poolw_ref,
                 wqkv_ref, bqkv_ref, wo_ref, bo_ref,
                 g1_ref, be1_ref, wf1_ref, bf1_ref, wf2_ref, bf2_ref,
                 g2_ref, be2_ref, w1_ref, b1_ref, w2_ref, b2_ref,
                 attn_ref, feat_ref, logits_ref, probs_ref,
                 *, num_heads, head_dim, hidden):
    x = x_ref[...]          # (R, H)   batch folded into rows
    smask = smask_ref[...]  # (R, R)   additive: 0 allowed / -1e9 pad or cross-batch

    # Fused QKV projection: one 96-lane matmul instead of 3x 32-lane matmuls.
    qkv = jnp.dot(x, wqkv_ref[...], preferred_element_type=jnp.float32) + bqkv_ref[...]

    scale = 1.0 / (head_dim ** 0.5)
    attn_out = jnp.zeros_like(x)
    for h in range(num_heads):                           # static, NH == 2
        lo = h * head_dim
        qh = qkv[:, lo:lo + head_dim]
        kh = qkv[:, hidden + lo:hidden + lo + head_dim]
        vh = qkv[:, 2 * hidden + lo:2 * hidden + lo + head_dim]

        scores = jnp.dot(qh, kh.T, preferred_element_type=jnp.float32) * scale + smask
        m = jnp.max(scores, axis=-1, keepdims=True)
        e = jnp.exp(scores - m)
        p = e * pl.reciprocal(jnp.sum(e, axis=-1, keepdims=True), approx=True)
        attn_ref[h] = p                                  # (R, R); diag blocks sliced in wrapper

        ctx_h = jnp.dot(p, vh, preferred_element_type=jnp.float32)
        # Fold ctx @ Wo per head (avoids concatenate / VMEM scratch).
        attn_out = attn_out + jnp.dot(ctx_h, wo_ref[lo:lo + head_dim, :],
                                      preferred_element_type=jnp.float32)
    attn_out = attn_out + bo_ref[...]

    h1 = _layer_norm(x + attn_out, g1_ref[...], be1_ref[...])
    ff = jnp.dot(h1, wf1_ref[...], preferred_element_type=jnp.float32) + bf1_ref[...]
    # TODO(synk): HF BERT uses exact erf GELU; tanh approximation kept (synthetic encoder).
    ff = jax.nn.gelu(ff, approximate=True)
    ff = jnp.dot(ff, wf2_ref[...], preferred_element_type=jnp.float32) + bf2_ref[...]
    h2 = _layer_norm(h1 + ff, g2_ref[...], be2_ref[...])

    # Masked mean pooling as a single matmul with precomputed normalized weights.
    feat = jnp.dot(poolw_ref[...], h2, preferred_element_type=jnp.float32)   # (B, H)
    # TODO(synk): nn.Dropout(p) is identity at inference; no dropout applied.
    feat_ref[...] = feat

    z = jnp.tanh(jnp.dot(feat, w1_ref[...], preferred_element_type=jnp.float32)
                 + b1_ref[...])
    logits = jnp.dot(z, w2_ref[...], preferred_element_type=jnp.float32) + b2_ref[...]
    logits_ref[...] = logits

    mx = jnp.max(logits, axis=-1, keepdims=True)          # softmax over labels
    e2 = jnp.exp(logits - mx)
    probs_ref[...] = e2 * pl.reciprocal(jnp.sum(e2, axis=-1, keepdims=True), approx=True)


# -----------------------------------------------------------------------------
# Wrapper
# -----------------------------------------------------------------------------
WEIGHT_ORDER = ["wqkv", "bqkv", "wo", "bo", "g1", "be1",
                "wf1", "bf1", "wf2", "bf2", "g2", "be2",
                "w1", "b1", "w2", "b2"]


def _full_spec(shape):
    zeros = (0,) * len(shape)
    return pl.BlockSpec(shape, lambda i, _z=zeros: _z)


def fused_forward(x, score_mask, pool_w, params):
    """x: (R,H) f32, score_mask: (R,R) f32, pool_w: (B,R) f32."""
    weights = [params[n] for n in WEIGHT_ORDER]
    args = (x, score_mask, pool_w, *weights)
    in_specs = [_full_spec(a.shape) for a in args]

    out_shape = (jax.ShapeDtypeStruct((NH, R, R), jnp.float32),      # attention probs
                 jax.ShapeDtypeStruct((B, H), jnp.float32),          # pooled features
                 jax.ShapeDtypeStruct((B, NUM_LABELS), jnp.float32),  # logits
                 jax.ShapeDtypeStruct((B, NUM_LABELS), jnp.float32))  # softmax probs
    out_specs = tuple(_full_spec(s.shape) for s in out_shape)

    kernel = functools.partial(fused_kernel, num_heads=NH, head_dim=HD, hidden=H)
    # NOTE: whole problem is a few KB -> single grid step. If scaled to real
    # BERT sizes, block over S / FF and split rows across grid steps (v7x 2-TC).
    return pl.pallas_call(
        kernel,
        out_shape=out_shape,
        grid=(1,),
        in_specs=in_specs,
        out_specs=out_specs,
        compiler_params=pltpu.CompilerParams(dimension_semantics=("arbitrary",)),
    )(*args)


def init_params(key):
    ks = jax.random.split(key, 10)
    n = lambda k, shape, s=0.02: jax.random.normal(k, shape, jnp.float32) * s
    return {
        "word_emb": n(ks[0], (VOCAB, H)),
        "pos_emb": n(ks[1], (S, H)),
        # encoder layer (QKV fused into one (H, 3H) weight)
        "wqkv": n(ks[2], (H, 3 * H)), "bqkv": jnp.zeros((1, 3 * H), jnp.float32),
        "wo": n(ks[3], (H, H)), "bo": jnp.zeros((1, H), jnp.float32),
        "g1": jnp.ones((1, H), jnp.float32), "be1": jnp.zeros((1, H), jnp.float32),
        "wf1": n(ks[4], (H, FF)), "bf1": jnp.zeros((1, FF), jnp.float32),
        "wf2": n(ks[5], (FF, H)), "bf2": jnp.zeros((1, H), jnp.float32),
        "g2": jnp.ones((1, H), jnp.float32), "be2": jnp.zeros((1, H), jnp.float32),
        # classification head: Linear(H,H) -> Tanh -> Linear(H,num_labels)
        "w1": n(ks[6], (H, H)), "b1": jnp.zeros((1, H), jnp.float32),
        "w2": n(ks[7], (H, NUM_LABELS)), "b2": jnp.zeros((1, NUM_LABELS), jnp.float32),
    }


def sentence_transformer_forward(params, input_id, attention_mask):
    """Mirrors SentenceTransformer.forward.

    input_id:       (B, 1, S) int32
    attention_mask: (B, 1, S) int32/float
    returns (predictions_scalar, logits, attentions_tuple, features)
    """
    ids = jnp.squeeze(input_id, axis=1)                               # (B, S)
    mask = jnp.squeeze(attention_mask, axis=1).astype(jnp.float32)    # (B, S)

    # --- synthetic "transformer" embeddings (glue) ---
    emb = jnp.take(params["word_emb"], ids, axis=0) + params["pos_emb"][None]  # (B,S,H)
    x = emb.reshape(R, H)                                             # batch folded

    # Additive attention score mask (R,R): block-diagonal per batch + key padding.
    key_mask = mask.reshape(1, R)                                     # (1, R)
    batch_ids = jnp.repeat(jnp.arange(B), S)                          # (R,)
    same_batch = (batch_ids[:, None] == batch_ids[None, :]).astype(jnp.float32)
    allowed = same_batch * key_mask                                   # (R, R) in {0,1}
    score_mask = (allowed - 1.0) * 1e9

    # Normalized masked-mean pooling weights (B, R): pooling == pool_w @ hidden.
    sel = (jnp.arange(B)[:, None] == batch_ids[None, :]).astype(jnp.float32)  # (B, R)
    pool_w = sel * key_mask
    pool_w = pool_w / jnp.maximum(jnp.sum(pool_w, axis=1, keepdims=True), 1e-9)

    attn_full, features, logits, probs = fused_forward(x, score_mask, pool_w, params)

    # Per-batch attention probs are the diagonal (S,S) blocks of the folded layout.
    attn = jnp.stack(
        [attn_full[:, b * S:(b + 1) * S, b * S:(b + 1) * S] for b in range(B)], axis=0)
    attentions = (attn,)                                              # one layer

    # predictions = softmax(logits).flatten(); predictions[1] - predictions[0]
    flat = probs.reshape(-1)
    predictions = flat[1] - flat[0]
    return predictions, logits, attentions, features


if __name__ == "__main__":
    key = jax.random.PRNGKey(0)
    pkey, ikey = jax.random.split(key)
    params = init_params(pkey)

    input_id = jax.random.randint(ikey, (B, 1, S), 0, VOCAB, dtype=jnp.int32)
    attention_mask = jnp.ones((B, 1, S), jnp.int32)
    attention_mask = attention_mask.at[1, :, 6:].set(0)  # pad tail of 2nd example

    preds, logits, attentions, features = sentence_transformer_forward(
        params, input_id, attention_mask)
    jax.block_until_ready((preds, logits, attentions, features))

    assert preds.shape == ()
    assert logits.shape == (B, NUM_LABELS)
    assert attentions[0].shape == (B, NH, S, S)
    assert features.shape == (B, H)
    assert bool(jnp.all(jnp.isfinite(attentions[0])))
    assert bool(jnp.all(jnp.isfinite(logits)))
    print("KERNEL_OK")
</pallas_src>

<mosaic_0001>
module attributes {stable_mosaic.version = 11 : i64} {
  func.func @fused_kernel(%arg0: i32, %arg1: memref<16x32xf32, #tpu.memory_space<vmem>>, %arg2: memref<16x16xf32, #tpu.memory_space<vmem>>, %arg3: memref<2x16xf32, #tpu.memory_space<vmem>>, %arg4: memref<32x96xf32, #tpu.memory_space<vmem>>, %arg5: memref<1x96xf32, #tpu.memory_space<vmem>>, %arg6: memref<32x32xf32, #tpu.memory_space<vmem>>, %arg7: memref<1x32xf32, #tpu.memory_space<vmem>>, %arg8: memref<1x32xf32, #tpu.memory_space<vmem>>, %arg9: memref<1x32xf32, #tpu.memory_space<vmem>>, %arg10: memref<32x64xf32, #tpu.memory_space<vmem>>, %arg11: memref<1x64xf32, #tpu.memory_space<vmem>>, %arg12: memref<64x32xf32, #tpu.memory_space<vmem>>, %arg13: memref<1x32xf32, #tpu.memory_space<vmem>>, %arg14: memref<1x32xf32, #tpu.memory_space<vmem>>, %arg15: memref<1x32xf32, #tpu.memory_space<vmem>>, %arg16: memref<32x32xf32, #tpu.memory_space<vmem>>, %arg17: memref<1x32xf32, #tpu.memory_space<vmem>>, %arg18: memref<32x2xf32, #tpu.memory_space<vmem>>, %arg19: memref<1x2xf32, #tpu.memory_space<vmem>>, %arg20: memref<2x16x16xf32, #tpu.memory_space<vmem>>, %arg21: memref<2x32xf32, #tpu.memory_space<vmem>>, %arg22: memref<2x2xf32, #tpu.memory_space<vmem>>, %arg23: memref<2x2xf32, #tpu.memory_space<vmem>>) attributes {dimension_semantics = [#tpu.dimension_semantics<arbitrary>], iteration_bounds = array<i64: 1>, scalar_prefetch = 0 : i64, scratch_operands = 0 : i64, tpu.core_type = #tpu.core_type<tc>, window_params = [{pipeline_mode = #tpu.pipeline_mode<synchronous>, transform_indices = @transform_0, window_bounds = array<i64: 16, 32>}, {pipeline_mode = #tpu.pipeline_mode<synchronous>, transform_indices = @transform_1, window_bounds = array<i64: 16, 16>}, {pipeline_mode = #tpu.pipeline_mode<synchronous>, transform_indices = @transform_2, window_bounds = array<i64: 2, 16>}, {pipeline_mode = #tpu.pipeline_mode<synchronous>, transform_indices = @transform_3, window_bounds = array<i64: 32, 96>}, {pipeline_mode = #tpu.pipeline_mode<synchronous>, transform_indices = @transform_4, window_bounds = array<i64: 1, 96>}, {pipeline_mode = #tpu.pipeline_mode<synchronous>, transform_indices = @transform_5, window_bounds = array<i64: 32, 32>}, {pipeline_mode = #tpu.pipeline_mode<synchronous>, transform_indices = @transform_6, window_bounds = array<i64: 1, 32>}, {pipeline_mode = #tpu.pipeline_mode<synchronous>, transform_indices = @transform_7, window_bounds = array<i64: 1, 32>}, {pipeline_mode = #tpu.pipeline_mode<synchronous>, transform_indices = @transform_8, window_bounds = array<i64: 1, 32>}, {pipeline_mode = #tpu.pipeline_mode<synchronous>, transform_indices = @transform_9, window_bounds = array<i64: 32, 64>}, {pipeline_mode = #tpu.pipeline_mode<synchronous>, transform_indices = @transform_10, window_bounds = array<i64: 1, 64>}, {pipeline_mode = #tpu.pipeline_mode<synchronous>, transform_indices = @transform_11, window_bounds = array<i64: 64, 32>}, {pipeline_mode = #tpu.pipeline_mode<synchronous>, transform_indices = @transform_12, window_bounds = array<i64: 1, 32>}, {pipeline_mode = #tpu.pipeline_mode<synchronous>, transform_indices = @transform_13, window_bounds = array<i64: 1, 32>}, {pipeline_mode = #tpu.pipeline_mode<synchronous>, transform_indices = @transform_14, window_bounds = array<i64: 1, 32>}, {pipeline_mode = #tpu.pipeline_mode<synchronous>, transform_indices = @transform_15, window_bounds = array<i64: 32, 32>}, {pipeline_mode = #tpu.pipeline_mode<synchronous>, transform_indices = @transform_16, window_bounds = array<i64: 1, 32>}, {pipeline_mode = #tpu.pipeline_mode<synchronous>, transform_indices = @transform_17, window_bounds = array<i64: 32, 2>}, {pipeline_mode = #tpu.pipeline_mode<synchronous>, transform_indices = @transform_18, window_bounds = array<i64: 1, 2>}, {pipeline_mode = #tpu.pipeline_mode<synchronous>, transform_indices = @transform_19, window_bounds = array<i64: 2, 16, 16>}, {pipeline_mode = #tpu.pipeline_mode<synchronous>, transform_indices = @transform_20, window_bounds = array<i64: 2, 32>}, {pipeline_mode = #tpu.pipeline_mode<synchronous>, transform_indices = @transform_21, window_bounds = array<i64: 2, 2>}, {pipeline_mode = #tpu.pipeline_mode<synchronous>, transform_indices = @transform_22, window_bounds = array<i64: 2, 2>}]} {
    %c0 = arith.constant 0 : index
    %c0_0 = arith.constant 0 : index
    %0 = vector.load %arg1[%c0, %c0_0] : memref<16x32xf32, #tpu.memory_space<vmem>>, vector<16x32xf32>
    %c0_1 = arith.constant 0 : index
    %c0_2 = arith.constant 0 : index
    %1 = vector.load %arg2[%c0_1, %c0_2] : memref<16x16xf32, #tpu.memory_space<vmem>>, vector<16x16xf32>
    %c0_3 = arith.constant 0 : index
    %c0_4 = arith.constant 0 : index
    %2 = vector.load %arg4[%c0_3, %c0_4] : memref<32x96xf32, #tpu.memory_space<vmem>>, vector<32x96xf32>
    %cst = arith.constant dense<0.000000e+00> : vector<16x96xf32>
    %3 = tpu.matmul %0, %2, %cst {dimension_numbers = #tpu.dot_dimension_numbers<[1], [0], [0], [1], [0, 0, 1, 1], [], []>} : vector<16x32xf32>, vector<32x96xf32>, vector<16x96xf32> -> vector<16x96xf32>
    %c0_5 = arith.constant 0 : index
    %c0_6 = arith.constant 0 : index
    %4 = vector.load %arg5[%c0_5, %c0_6] : memref<1x96xf32, #tpu.memory_space<vmem>>, vector<1x96xf32>
    %5 = vector.broadcast %4 : vector<1x96xf32> to vector<16x96xf32>
    %6 = arith.addf %3, %5 : vector<16x96xf32>
    %cst_7 = arith.constant 0.000000e+00 : f32
    %7 = vector.broadcast %cst_7 : f32 to vector<16x32xf32>
    %8 = vector.extract_strided_slice %6 {offsets = [0, 0], sizes = [16, 16], strides = [1, 1]} : vector<16x96xf32> to vector<16x16xf32>
    %9 = vector.extract_strided_slice %6 {offsets = [0, 32], sizes = [16, 16], strides = [1, 1]} : vector<16x96xf32> to vector<16x16xf32>
    %10 = vector.extract_strided_slice %6 {offsets = [0, 64], sizes = [16, 16], strides = [1, 1]} : vector<16x96xf32> to vector<16x16xf32>
    %11 = tpu.transpose %9, [1, 0] : vector<16x16xf32> -> vector<16x16xf32>
    %cst_8 = arith.constant dense<0.000000e+00> : vector<16x16xf32>
    %12 = tpu.matmul %8, %11, %cst_8 {dimension_numbers = #tpu.dot_dimension_numbers<[1], [0], [0], [1], [0, 0, 1, 1], [], []>} : vector<16x16xf32>, vector<16x16xf32>, vector<16x16xf32> -> vector<16x16xf32>
    %cst_9 = arith.constant 2.500000e-01 : f32
    %13 = vector.broadcast %cst_9 : f32 to vector<16x16xf32>
    %14 = arith.mulf %12, %13 : vector<16x16xf32>
    %15 = arith.addf %14, %1 : vector<16x16xf32>
    %cst_10 = arith.constant dense<0xFF800000> : vector<16xf32>
    %16 = vector.multi_reduction <maximumf>, %15, %cst_10 [1] : vector<16x16xf32> to vector<16xf32>
    %17 = vector.shape_cast %16 : vector<16xf32> to vector<16x1xf32>
    %18 = vector.broadcast %17 : vector<16x1xf32> to vector<16x16xf32>
    %19 = arith.subf %15, %18 : vector<16x16xf32>
    %20 = math.exp %19 : vector<16x16xf32>
    %cst_11 = arith.constant dense<0.000000e+00> : vector<16xf32>
    %21 = vector.multi_reduction <add>, %20, %cst_11 [1] : vector<16x16xf32> to vector<16xf32>
    %22 = vector.shape_cast %21 : vector<16xf32> to vector<16x1xf32>
    %23 = tpu.reciprocal %22 {approx = true} : vector<16x1xf32> -> vector<16x1xf32>
    %24 = vector.broadcast %23 : vector<16x1xf32> to vector<16x16xf32>
    %25 = arith.mulf %20, %24 : vector<16x16xf32>
    %c0_12 = arith.constant 0 : index
    %c0_13 = arith.constant 0 : index
    %c0_14 = arith.constant 0 : index
    %26 = vector.load %arg20[%c0_12, %c0_13, %c0_14] : memref<2x16x16xf32, #tpu.memory_space<vmem>>, vector<1x16x16xf32>
    %27 = vector.shape_cast %26 : vector<1x16x16xf32> to vector<16x16xf32>
    %28 = vector.shape_cast %25 : vector<16x16xf32> to vector<1x16x16xf32>
    tpu.vector_store %arg20[%c0_12, %c0_13, %c0_14], %28 {strides = array<i32>} : memref<2x16x16xf32, #tpu.memory_space<vmem>>, vector<1x16x16xf32>,
    %cst_15 = arith.constant dense<0.000000e+00> : vector<16x16xf32>
    %29 = tpu.matmul %25, %10, %cst_15 {dimension_numbers = #tpu.dot_dimension_numbers<[1], [0], [0], [1], [0, 0, 1, 1], [], []>} : vector<16x16xf32>, vector<16x16xf32>, vector<16x16xf32> -> vector<16x16xf32>
    %c0_16 = arith.constant 0 : index
    %c0_17 = arith.constant 0 : index
    %30 = vector.load %arg6[%c0_16, %c0_17] : memref<32x32xf32, #tpu.memory_space<vmem>>, vector<16x32xf32>
    %cst_18 = arith.constant dense<0.000000e+00> : vector<16x32xf32>
    %31 = tpu.matmul %29, %30, %cst_18 {dimension_numbers = #tpu.dot_dimension_numbers<[1], [0], [0], [1], [0, 0, 1, 1], [], []>} : vector<16x16xf32>, vector<16x32xf32>, vector<16x32xf32> -> vector<16x32xf32>
    %32 = arith.addf %7, %31 : vector<16x32xf32>
    %33 = vector.extract_strided_slice %6 {offsets = [0, 16], sizes = [16, 16], strides = [1, 1]} : vector<16x96xf32> to vector<16x16xf32>
    %34 = vector.extract_strided_slice %6 {offsets = [0, 48], sizes = [16, 16], strides = [1, 1]} : vector<16x96xf32> to vector<16x16xf32>
    %35 = vector.extract_strided_slice %6 {offsets = [0, 80], sizes = [16, 16], strides = [1, 1]} : vector<16x96xf32> to vector<16x16xf32>
    %36 = tpu.transpose %34, [1, 0] : vector<16x16xf32> -> vector<16x16xf32>
    %cst_19 = arith.constant dense<0.000000e+00> : vector<16x16xf32>
    %37 = tpu.matmul %33, %36, %cst_19 {dimension_numbers = #tpu.dot_dimension_numbers<[1], [0], [0], [1], [0, 0, 1, 1], [], []>} : vector<16x16xf32>, vector<16x16xf32>, vector<16x16xf32> -> vector<16x16xf32>
    %cst_20 = arith.constant 2.500000e-01 : f32
    %38 = vector.broadcast %cst_20 : f32 to vector<16x16xf32>
    %39 = arith.mulf %37, %38 : vector<16x16xf32>
    %40 = arith.addf %39, %1 : vector<16x16xf32>
    %cst_21 = arith.constant dense<0xFF800000> : vector<16xf32>
    %41 = vector.multi_reduction <maximumf>, %40, %cst_21 [1] : vector<16x16xf32> to vector<16xf32>
    %42 = vector.shape_cast %41 : vector<16xf32> to vector<16x1xf32>
    %43 = vector.broadcast %42 : vector<16x1xf32> to vector<16x16xf32>
    %44 = arith.subf %40, %43 : vector<16x16xf32>
    %45 = math.exp %44 : vector<16x16xf32>
    %cst_22 = arith.constant dense<0.000000e+00> : vector<16xf32>
    %46 = vector.multi_reduction <add>, %45, %cst_22 [1] : vector<16x16xf32> to vector<16xf32>
    %47 = vector.shape_cast %46 : vector<16xf32> to vector<16x1xf32>
    %48 = tpu.reciprocal %47 {approx = true} : vector<16x1xf32> -> vector<16x1xf32>
    %49 = vector.broadcast %48 : vector<16x1xf32> to vector<16x16xf32>
    %50 = arith.mulf %45, %49 : vector<16x16xf32>
    %c1 = arith.constant 1 : index
    %c0_23 = arith.constant 0 : index
    %c0_24 = arith.constant 0 : index
    %51 = vector.load %arg20[%c1, %c0_23, %c0_24] : memref<2x16x16xf32, #tpu.memory_space<vmem>>, vector<1x16x16xf32>
    %52 = vector.shape_cast %51 : vector<1x16x16xf32> to vector<16x16xf32>
    %53 = vector.shape_cast %50 : vector<16x16xf32> to vector<1x16x16xf32>
    tpu.vector_store %arg20[%c1, %c0_23, %c0_24], %53 {strides = array<i32>} : memref<2x16x16xf32, #tpu.memory_space<vmem>>, vector<1x16x16xf32>,
    %cst_25 = arith.constant dense<0.000000e+00> : vector<16x16xf32>
    %54 = tpu.matmul %50, %35, %cst_25 {dimension_numbers = #tpu.dot_dimension_numbers<[1], [0], [0], [1], [0, 0, 1, 1], [], []>} : vector<16x16xf32>, vector<16x16xf32>, vector<16x16xf32> -> vector<16x16xf32>
    %c16 = arith.constant 16 : index
    %c0_26 = arith.constant 0 : index
    %55 = vector.load %arg6[%c16, %c0_26] : memref<32x32xf32, #tpu.memory_space<vmem>>, vector<16x32xf32>
    %cst_27 = arith.constant dense<0.000000e+00> : vector<16x32xf32>
    %56 = tpu.matmul %54, %55, %cst_27 {dimension_numbers = #tpu.dot_dimension_numbers<[1], [0], [0], [1], [0, 0, 1, 1], [], []>} : vector<16x16xf32>, vector<16x32xf32>, vector<16x32xf32> -> vector<16x32xf32>
    %57 = arith.addf %32, %56 : vector<16x32xf32>
    %c0_28 = arith.constant 0 : index
    %c0_29 = arith.constant 0 : index
    %58 = vector.load %arg7[%c0_28, %c0_29] : memref<1x32xf32, #tpu.memory_space<vmem>>, vector<1x32xf32>
    %59 = vector.broadcast %58 : vector<1x32xf32> to vector<16x32xf32>
    %60 = arith.addf %57, %59 : vector<16x32xf32>
    %61 = arith.addf %0, %60 : vector<16x32xf32>
    %c0_30 = arith.constant 0 : index
    %c0_31 = arith.constant 0 : index
    %62 = vector.load %arg8[%c0_30, %c0_31] : memref<1x32xf32, #tpu.memory_space<vmem>>, vector<1x32xf32>
    %c0_32 = arith.constant 0 : index
    %c0_33 = arith.constant 0 : index
    %63 = vector.load %arg9[%c0_32, %c0_33] : memref<1x32xf32, #tpu.memory_space<vmem>>, vector<1x32xf32>
    %cst_34 = arith.constant dense<0.000000e+00> : vector<16xf32>
    %64 = vector.multi_reduction <add>, %61, %cst_34 [1] : vector<16x32xf32> to vector<16xf32>
    %65 = vector.shape_cast %64 : vector<16xf32> to vector<16x1xf32>
    %cst_35 = arith.constant 3.200000e+01 : f32
    %66 = vector.broadcast %cst_35 : f32 to vector<16x1xf32>
    %67 = arith.divf %65, %66 : vector<16x1xf32>
    %68 = vector.broadcast %67 : vector<16x1xf32> to vector<16x32xf32>
    %69 = arith.subf %61, %68 : vector<16x32xf32>
    %70 = arith.mulf %69, %69 : vector<16x32xf32>
    %cst_36 = arith.constant dense<0.000000e+00> : vector<16xf32>
    %71 = vector.multi_reduction <add>, %70, %cst_36 [1] : vector<16x32xf32> to vector<16xf32>
    %72 = vector.shape_cast %71 : vector<16xf32> to vector<16x1xf32>
    %cst_37 = arith.constant 3.200000e+01 : f32
    %73 = vector.broadcast %cst_37 : f32 to vector<16x1xf32>
    %74 = arith.divf %72, %73 : vector<16x1xf32>
    %75 = vector.broadcast %67 : vector<16x1xf32> to vector<16x32xf32>
    %76 = arith.subf %61, %75 : vector<16x32xf32>
    %cst_38 = arith.constant 9.99999996E-13 : f32
    %77 = vector.broadcast %cst_38 : f32 to vector<16x1xf32>
    %78 = arith.addf %74, %77 : vector<16x1xf32>
    %79 = math.rsqrt %78 : vector<16x1xf32>
    %80 = vector.broadcast %79 : vector<16x1xf32> to vector<16x32xf32>
    %81 = arith.mulf %76, %80 : vector<16x32xf32>
    %82 = vector.broadcast %62 : vector<1x32xf32> to vector<16x32xf32>
    %83 = arith.mulf %81, %82 : vector<16x32xf32>
    %84 = vector.broadcast %63 : vector<1x32xf32> to vector<16x32xf32>
    %85 = arith.addf %83, %84 : vector<16x32xf32>
    %c0_39 = arith.constant 0 : index
    %c0_40 = arith.constant 0 : index
    %86 = vector.load %arg10[%c0_39, %c0_40] : memref<32x64xf32, #tpu.memory_space<vmem>>, vector<32x64xf32>
    %cst_41 = arith.constant dense<0.000000e+00> : vector<16x64xf32>
    %87 = tpu.matmul %85, %86, %cst_41 {dimension_numbers = #tpu.dot_dimension_numbers<[1], [0], [0], [1], [0, 0, 1, 1], [], []>} : vector<16x32xf32>, vector<32x64xf32>, vector<16x64xf32> -> vector<16x64xf32>
    %c0_42 = arith.constant 0 : index
    %c0_43 = arith.constant 0 : index
    %88 = vector.load %arg11[%c0_42, %c0_43] : memref<1x64xf32, #tpu.memory_space<vmem>>, vector<1x64xf32>
    %89 = vector.broadcast %88 : vector<1x64xf32> to vector<16x64xf32>
    %90 = arith.addf %87, %89 : vector<16x64xf32>
    %91 = arith.mulf %90, %90 : vector<16x64xf32>
    %92 = arith.mulf %90, %91 : vector<16x64xf32>
    %cst_44 = arith.constant 4.471500e-02 : f32
    %93 = vector.broadcast %cst_44 : f32 to vector<16x64xf32>
    %94 = arith.mulf %93, %92 : vector<16x64xf32>
    %95 = arith.addf %90, %94 : vector<16x64xf32>
    %cst_45 = arith.constant 0.797884583 : f32
    %96 = vector.broadcast %cst_45 : f32 to vector<16x64xf32>
    %97 = arith.mulf %96, %95 : vector<16x64xf32>
    %98 = math.tanh %97 : vector<16x64xf32>
    %cst_46 = arith.constant 1.000000e+00 : f32
    %99 = vector.broadcast %cst_46 : f32 to vector<16x64xf32>
    %100 = arith.addf %99, %98 : vector<16x64xf32>
    %cst_47 = arith.constant 5.000000e-01 : f32
    %101 = vector.broadcast %cst_47 : f32 to vector<16x64xf32>
    %102 = arith.mulf %101, %100 : vector<16x64xf32>
    %103 = arith.mulf %90, %102 : vector<16x64xf32>
    %c0_48 = arith.constant 0 : index
    %c0_49 = arith.constant 0 : index
    %104 = vector.load %arg12[%c0_48, %c0_49] : memref<64x32xf32, #tpu.memory_space<vmem>>, vector<64x32xf32>
    %cst_50 = arith.constant dense<0.000000e+00> : vector<16x32xf32>
    %105 = tpu.matmul %103, %104, %cst_50 {dimension_numbers = #tpu.dot_dimension_numbers<[1], [0], [0], [1], [0, 0, 1, 1], [], []>} : vector<16x64xf32>, vector<64x32xf32>, vector<16x32xf32> -> vector<16x32xf32>
    %c0_51 = arith.constant 0 : index
    %c0_52 = arith.constant 0 : index
    %106 = vector.load %arg13[%c0_51, %c0_52] : memref<1x32xf32, #tpu.memory_space<vmem>>, vector<1x32xf32>
    %107 = vector.broadcast %106 : vector<1x32xf32> to vector<16x32xf32>
    %108 = arith.addf %105, %107 : vector<16x32xf32>
    %109 = arith.addf %85, %108 : vector<16x32xf32>
    %c0_53 = arith.constant 0 : index
    %c0_54 = arith.constant 0 : index
    %110 = vector.load %arg14[%c0_53, %c0_54] : memref<1x32xf32, #tpu.memory_space<vmem>>, vector<1x32xf32>
    %c0_55 = arith.constant 0 : index
    %c0_56 = arith.constant 0 : index
    %111 = vector.load %arg15[%c0_55, %c0_56] : memref<1x32xf32, #tpu.memory_space<vmem>>, vector<1x32xf32>
    %cst_57 = arith.constant dense<0.000000e+00> : vector<16xf32>
    %112 = vector.multi_reduction <add>, %109, %cst_57 [1] : vector<16x32xf32> to vector<16xf32>
    %113 = vector.shape_cast %112 : vector<16xf32> to vector<16x1xf32>
    %cst_58 = arith.constant 3.200000e+01 : f32
    %114 = vector.broadcast %cst_58 : f32 to vector<16x1xf32>
    %115 = arith.divf %113, %114 : vector<16x1xf32>
    %116 = vector.broadcast %115 : vector<16x1xf32> to vector<16x32xf32>
    %117 = arith.subf %109, %116 : vector<16x32xf32>
    %118 = arith.mulf %117, %117 : vector<16x32xf32>
    %cst_59 = arith.constant dense<0.000000e+00> : vector<16xf32>
    %119 = vector.multi_reduction <add>, %118, %cst_59 [1] : vector<16x32xf32> to vector<16xf32>
    %120 = vector.shape_cast %119 : vector<16xf32> to vector<16x1xf32>
    %cst_60 = arith.constant 3.200000e+01 : f32
    %121 = vector.broadcast %cst_60 : f32 to vector<16x1xf32>
    %122 = arith.divf %120, %121 : vector<16x1xf32>
    %123 = vector.broadcast %115 : vector<16x1xf32> to vector<16x32xf32>
    %124 = arith.subf %109, %123 : vector<16x32xf32>
    %cst_61 = arith.constant 9.99999996E-13 : f32
    %125 = vector.broadcast %cst_61 : f32 to vector<16x1xf32>
    %126 = arith.addf %122, %125 : vector<16x1xf32>
    %127 = math.rsqrt %126 : vector<16x1xf32>
    %128 = vector.broadcast %127 : vector<16x1xf32> to vector<16x32xf32>
    %129 = arith.mulf %124, %128 : vector<16x32xf32>
    %130 = vector.broadcast %110 : vector<1x32xf32> to vector<16x32xf32>
    %131 = arith.mulf %129, %130 : vector<16x32xf32>
    %132 = vector.broadcast %111 : vector<1x32xf32> to vector<16x32xf32>
    %133 = arith.addf %131, %132 : vector<16x32xf32>
    %c0_62 = arith.constant 0 : index
    %c0_63 = arith.constant 0 : index
    %134 = vector.load %arg3[%c0_62, %c0_63] : memref<2x16xf32, #tpu.memory_space<vmem>>, vector<2x16xf32>
    %cst_64 = arith.constant dense<0.000000e+00> : vector<2x32xf32>
    %135 = tpu.matmul %134, %133, %cst_64 {dimension_numbers = #tpu.dot_dimension_numbers<[1], [0], [0], [1], [0, 0, 1, 1], [], []>} : vector<2x16xf32>, vector<16x32xf32>, vector<2x32xf32> -> vector<2x32xf32>
    %c0_65 = arith.constant 0 : index
    %c0_66 = arith.constant 0 : index
    %136 = vector.load %arg21[%c0_65, %c0_66] : memref<2x32xf32, #tpu.memory_space<vmem>>, vector<2x32xf32>
    tpu.vector_store %arg21[%c0_65, %c0_66], %135 {strides = array<i32>} : memref<2x32xf32, #tpu.memory_space<vmem>>, vector<2x32xf32>,
    %c0_67 = arith.constant 0 : index
    %c0_68 = arith.constant 0 : index
    %137 = vector.load %arg16[%c0_67, %c0_68] : memref<32x32xf32, #tpu.memory_space<vmem>>, vector<32x32xf32>
    %cst_69 = arith.constant dense<0.000000e+00> : vector<2x32xf32>
    %138 = tpu.matmul %135, %137, %cst_69 {dimension_numbers = #tpu.dot_dimension_numbers<[1], [0], [0], [1], [0, 0, 1, 1], [], []>} : vector<2x32xf32>, vector<32x32xf32>, vector<2x32xf32> -> vector<2x32xf32>
    %c0_70 = arith.constant 0 : index
    %c0_71 = arith.constant 0 : index
    %139 = vector.load %arg17[%c0_70, %c0_71] : memref<1x32xf32, #tpu.memory_space<vmem>>, vector<1x32xf32>
    %140 = vector.broadcast %139 : vector<1x32xf32> to vector<2x32xf32>
    %141 = arith.addf %138, %140 : vector<2x32xf32>
    %142 = math.tanh %141 : vector<2x32xf32>
    %c0_72 = arith.constant 0 : index
    %c0_73 = arith.constant 0 : index
    %143 = vector.load %arg18[%c0_72, %c0_73] : memref<32x2xf32, #tpu.memory_space<vmem>>, vector<32x2xf32>
    %cst_74 = arith.constant dense<0.000000e+00> : vector<2x2xf32>
    %144 = tpu.matmul %142, %143, %cst_74 {dimension_numbers = #tpu.dot_dimension_numbers<[1], [0], [0], [1], [0, 0, 1, 1], [], []>} : vector<2x32xf32>, vector<32x2xf32>, vector<2x2xf32> -> vector<2x2xf32>
    %c0_75 = arith.constant 0 : index
    %c0_76 = arith.constant 0 : index
    %145 = vector.load %arg19[%c0_75, %c0_76] : memref<1x2xf32, #tpu.memory_space<vmem>>, vector<1x2xf32>
    %146 = vector.broadcast %145 : vector<1x2xf32> to vector<2x2xf32>
    %147 = arith.addf %144, %146 : vector<2x2xf32>
    %c0_77 = arith.constant 0 : index
    %c0_78 = arith.constant 0 : index
    %148 = vector.load %arg22[%c0_77, %c0_78] : memref<2x2xf32, #tpu.memory_space<vmem>>, vector<2x2xf32>
    tpu.vector_store %arg22[%c0_77, %c0_78], %147 {strides = array<i32>} : memref<2x2xf32, #tpu.memory_space<vmem>>, vector<2x2xf32>,
    %cst_79 = arith.constant dense<0xFF800000> : vector<2xf32>
    %149 = vector.multi_reduction <maximumf>, %147, %cst_79 [1] : vector<2x2xf32> to vector<2xf32>
    %150 = vector.shape_cast %149 : vector<2xf32> to vector<2x1xf32>
    %151 = vector.broadcast %150 : vector<2x1xf32> to vector<2x2xf32>
    %152 = arith.subf %147, %151 : vector<2x2xf32>
    %153 = math.exp %152 : vector<2x2xf32>
    %cst_80 = arith.constant dense<0.000000e+00> : vector<2xf32>
    %154 = vector.multi_reduction <add>, %153, %cst_80 [1] : vector<2x2xf32> to vector<2xf32>
    %155 = vector.shape_cast %154 : vector<2xf32> to vector<2x1xf32>
    %156 = tpu.reciprocal %155 {approx = true} : vector<2x1xf32> -> vector<2x1xf32>
    %157 = vector.broadcast %156 : vector<2x1xf32> to vector<2x2xf32>
    %158 = arith.mulf %153, %157 : vector<2x2xf32>
    %c0_81 = arith.constant 0 : index
    %c0_82 = arith.constant 0 : index
    %159 = vector.load %arg23[%c0_81, %c0_82] : memref<2x2xf32, #tpu.memory_space<vmem>>, vector<2x2xf32>
    tpu.vector_store %arg23[%c0_81, %c0_82], %158 {strides = array<i32>} : memref<2x2xf32, #tpu.memory_space<vmem>>, vector<2x2xf32>,
    return
  }
  func.func @transform_0(%arg0: i32) -> (i32, i32) {
    %c0_i32 = arith.constant 0 : i32
    %c0_i32_0 = arith.constant 0 : i32
    %c0_i32_1 = arith.constant 0 : i32
    return %c0_i32, %c0_i32_0 : i32, i32
  }
  func.func @transform_1(%arg0: i32) -> (i32, i32) {
    %c0_i32 = arith.constant 0 : i32
    %c0_i32_0 = arith.constant 0 : i32
    %c0_i32_1 = arith.constant 0 : i32
    return %c0_i32, %c0_i32_0 : i32, i32
  }
  func.func @transform_2(%arg0: i32) -> (i32, i32) {
    %c0_i32 = arith.constant 0 : i32
    %c0_i32_0 = arith.constant 0 : i32
    %c0_i32_1 = arith.constant 0 : i32
    return %c0_i32, %c0_i32_0 : i32, i32
  }
  func.func @transform_3(%arg0: i32) -> (i32, i32) {
    %c0_i32 = arith.constant 0 : i32
    %c0_i32_0 = arith.constant 0 : i32
    %c0_i32_1 = arith.constant 0 : i32
    return %c0_i32, %c0_i32_0 : i32, i32
  }
  func.func @transform_4(%arg0: i32) -> (i32, i32) {
    %c0_i32 = arith.constant 0 : i32
    %c0_i32_0 = arith.constant 0 : i32
    %c0_i32_1 = arith.constant 0 : i32
    return %c0_i32, %c0_i32_0 : i32, i32
  }
  func.func @transform_5(%arg0: i32) -> (i32, i32) {
    %c0_i32 = arith.constant 0 : i32
    %c0_i32_0 = arith.constant 0 : i32
    %c0_i32_1 = arith.constant 0 : i32
    return %c0_i32, %c0_i32_0 : i32, i32
  }
  func.func @transform_6(%arg0: i32) -> (i32, i32) {
    %c0_i32 = arith.constant 0 : i32
    %c0_i32_0 = arith.constant 0 : i32
    %c0_i32_1 = arith.constant 0 : i32
    return %c0_i32, %c0_i32_0 : i32, i32
  }
  func.func @transform_7(%arg0: i32) -> (i32, i32) {
    %c0_i32 = arith.constant 0 : i32
    %c0_i32_0 = arith.constant 0 : i32
    %c0_i32_1 = arith.constant 0 : i32
    return %c0_i32, %c0_i32_0 : i32, i32
  }
  func.func @transform_8(%arg0: i32) -> (i32, i32) {
    %c0_i32 = arith.constant 0 : i32
    %c0_i32_0 = arith.constant 0 : i32
    %c0_i32_1 = arith.constant 0 : i32
    return %c0_i32, %c0_i32_0 : i32, i32
  }
  func.func @transform_9(%arg0: i32) -> (i32, i32) {
    %c0_i32 = arith.constant 0 : i32
    %c0_i32_0 = arith.constant 0 : i32
    %c0_i32_1 = arith.constant 0 : i32
    return %c0_i32, %c0_i32_0 : i32, i32
  }
  func.func @transform_10(%arg0: i32) -> (i32, i32) {
    %c0_i32 = arith.constant 0 : i32
    %c0_i32_0 = arith.constant 0 : i32
    %c0_i32_1 = arith.constant 0 : i32
    return %c0_i32, %c0_i32_0 : i32, i32
  }
  func.func @transform_11(%arg0: i32) -> (i32, i32) {
    %c0_i32 = arith.constant 0 : i32
    %c0_i32_0 = arith.constant 0 : i32
    %c0_i32_1 = arith.constant 0 : i32
    return %c0_i32, %c0_i32_0 : i32, i32
  }
  func.func @transform_12(%arg0: i32) -> (i32, i32) {
    %c0_i32 = arith.constant 0 : i32
    %c0_i32_0 = arith.constant 0 : i32
    %c0_i32_1 = arith.constant 0 : i32
    return %c0_i32, %c0_i32_0 : i32, i32
  }
  func.func @transform_13(%arg0: i32) -> (i32, i32) {
    %c0_i32 = arith.constant 0 : i32
    %c0_i32_0 = arith.constant 0 : i32
    %c0_i32_1 = arith.constant 0 : i32
    return %c0_i32, %c0_i32_0 : i32, i32
  }
  func.func @transform_14(%arg0: i32) -> (i32, i32) {
    %c0_i32 = arith.constant 0 : i32
    %c0_i32_0 = arith.constant 0 : i32
    %c0_i32_1 = arith.constant 0 : i32
    return %c0_i32, %c0_i32_0 : i32, i32
  }
  func.func @transform_15(%arg0: i32) -> (i32, i32) {
    %c0_i32 = arith.constant 0 : i32
    %c0_i32_0 = arith.constant 0 : i32
    %c0_i32_1 = arith.constant 0 : i32
    return %c0_i32, %c0_i32_0 : i32, i32
  }
  func.func @transform_16(%arg0: i32) -> (i32, i32) {
    %c0_i32 = arith.constant 0 : i32
    %c0_i32_0 = arith.constant 0 : i32
    %c0_i32_1 = arith.constant 0 : i32
    return %c0_i32, %c0_i32_0 : i32, i32
  }
  func.func @transform_17(%arg0: i32) -> (i32, i32) {
    %c0_i32 = arith.constant 0 : i32
    %c0_i32_0 = arith.constant 0 : i32
    %c0_i32_1 = arith.constant 0 : i32
    return %c0_i32, %c0_i32_0 : i32, i32
  }
  func.func @transform_18(%arg0: i32) -> (i32, i32) {
    %c0_i32 = arith.constant 0 : i32
    %c0_i32_0 = arith.constant 0 : i32
    %c0_i32_1 = arith.constant 0 : i32
    return %c0_i32, %c0_i32_0 : i32, i32
  }
  func.func @transform_19(%arg0: i32) -> (i32, i32, i32) {
    %c0_i32 = arith.constant 0 : i32
    %c0_i32_0 = arith.constant 0 : i32
    %c0_i32_1 = arith.constant 0 : i32
    %c0_i32_2 = arith.constant 0 : i32
    return %c0_i32, %c0_i32_0, %c0_i32_1 : i32, i32, i32
  }
  func.func @transform_20(%arg0: i32) -> (i32, i32) {
    %c0_i32 = arith.constant 0 : i32
    %c0_i32_0 = arith.constant 0 : i32
    %c0_i32_1 = arith.constant 0 : i32
    return %c0_i32, %c0_i32_0 : i32, i32
  }
  func.func @transform_21(%arg0: i32) -> (i32, i32) {
    %c0_i32 = arith.constant 0 : i32
    %c0_i32_0 = arith.constant 0 : i32
    %c0_i32_1 = arith.constant 0 : i32
    return %c0_i32, %c0_i32_0 : i32, i32
  }
  func.func @transform_22(%arg0: i32) -> (i32, i32) {
    %c0_i32 = arith.constant 0 : i32
    %c0_i32_0 = arith.constant 0 : i32
    %c0_i32_1 = arith.constant 0 : i32
    return %c0_i32, %c0_i32_0 : i32, i32
  }
}

</mosaic_0001>

<llo_original>
// kernel: tpu_custom_call.1
$region0: #{tpu_custom_call.1}
  #allocation0 [shape = 'u32[]', space=smem, size = 0x4, offset = 0x4, fixed_abs, tag = 'smem constant byte address 0x4 - core index']
  #allocation1 [shape = 'u32[144,128]{1,0:T(1,128)}', space=vmem, size = 0x12000, scoped, tag = 'internal scratch']
  %s0 = inlined_call_operand.hbm [shape: f32[16,32], index: 0, kind: input, shape index: {}]
  %s1 = inlined_call_operand.hbm [shape: f32[16,16], index: 1, kind: input, shape index: {}]
  %s2 = inlined_call_operand.hbm [shape: f32[2,16], index: 2, kind: input, shape index: {}]
  %s3 = inlined_call_operand.vmem [shape: f32[32,96], index: 3, kind: input, shape index: {}]
  %s4 = inlined_call_operand.hbm [shape: f32[1,96], index: 4, kind: input, shape index: {}]
  %s5 = inlined_call_operand.vmem [shape: f32[32,32], index: 5, kind: input, shape index: {}]
  %s6 = inlined_call_operand.hbm [shape: f32[1,32], index: 6, kind: input, shape index: {}]
  %s7 = inlined_call_operand.hbm [shape: f32[1,32], index: 7, kind: input, shape index: {}]
  %s8 = inlined_call_operand.hbm [shape: f32[1,32], index: 8, kind: input, shape index: {}]
  %s9 = inlined_call_operand.vmem [shape: f32[32,64], index: 9, kind: input, shape index: {}]
  %s10 = inlined_call_operand.vmem [shape: f32[1,64], index: 10, kind: input, shape index: {}]
  %s11 = inlined_call_operand.vmem [shape: f32[64,32], index: 11, kind: input, shape index: {}]
  %s12 = inlined_call_operand.vmem [shape: f32[1,32], index: 12, kind: input, shape index: {}]
  %s13 = inlined_call_operand.vmem [shape: f32[1,32], index: 13, kind: input, shape index: {}]
  %s14 = inlined_call_operand.vmem [shape: f32[1,32], index: 14, kind: input, shape index: {}]
  %s15 = inlined_call_operand.vmem [shape: f32[32,32], index: 15, kind: input, shape index: {}]
  %s16 = inlined_call_operand.vmem [shape: f32[1,32], index: 16, kind: input, shape index: {}]
  %s17 = inlined_call_operand.vmem [shape: f32[32,2], index: 17, kind: input, shape index: {}]
  %s18 = inlined_call_operand.vmem [shape: f32[1,2], index: 18, kind: input, shape index: {}]
  %s19 = inlined_call_operand.hbm [shape: f32[2,16,16], index: 19, kind: output, shape index: {0}]
  %s20 = inlined_call_operand.hbm [shape: f32[2,32], index: 20, kind: output, shape index: {1}]
  %s21 = inlined_call_operand.hbm [shape: f32[2,2], index: 21, kind: output, shape index: {2}]
  %s22 = inlined_call_operand.hbm [shape: f32[2,2], index: 22, kind: output, shape index: {3}]
  %23 = xla_tuple %s19, %s20, %s21, %s22
  %s24 = sld [smem:[#allocation0]]
  $region138: #{tpu_custom_call.1} parent=0
    _
  %s26 = ssub.s32 1, %s24
  %s27 = scalar_select 0, %s26, %s24
  $region1: #{tpu_custom_call.1} parent=0
    #allocation2 [shape = 'u8[8192]{0}', space=vmem, size = 0x2000, scoped, tag = 'input window, operand 0, single buffered']
    #allocation3 [shape = 's32[1]{0}', space=sflag, size = 0x4, scoped, tag = 'scoped memory for tpu_custom_call.1']
    #allocation4 [shape = 's32[1]{0}', space=sflag, size = 0x4, scoped, tag = 'scoped memory for tpu_custom_call.1']
    #allocation5 [shape = 'u8[8192]{0}', space=vmem, size = 0x2000, scoped, tag = 'input window, operand 1, single buffered']
    #allocation6 [shape = 's32[1]{0}', space=sflag, size = 0x4, scoped, tag = 'scoped memory for tpu_custom_call.1']
    #allocation7 [shape = 'u8[1024]{0}', space=vmem, size = 0x400, scoped, tag = 'input window, operand 2, single buffered']
    #allocation8 [shape = 'u8[512]{0}', space=vmem, size = 0x400, scoped, tag = 'input window, operand 4, single buffered']
    #allocation9 [shape = 's32[1]{0}', space=sflag, size = 0x4, scoped, tag = 'scoped memory for tpu_custom_call.1']
    #allocation10 [shape = 'u8[512]{0}', space=vmem, size = 0x400, scoped, tag = 'input window, operand 6, single buffered']
    #allocation11 [shape = 'u8[512]{0}', space=vmem, size = 0x400, scoped, tag = 'input window, operand 7, single buffered']
    #allocation12 [shape = 's32[1]{0}', space=sflag, size = 0x4, scoped, tag = 'scoped memory for tpu_custom_call.1']
    #allocation13 [shape = 'u8[512]{0}', space=vmem, size = 0x400, scoped, tag = 'input window, operand 8, single buffered']
    #allocation14 [shape = 'u8[16384]{0}', space=vmem, size = 0x4000, scoped, tag = 'output window, operand 0, single buffered']
    #allocation15 [shape = 'u8[1024]{0}', space=vmem, size = 0x400, scoped, tag = 'output window, operand 1, single buffered']
    #allocation16 [shape = 's32[1]{0}', space=sflag, size = 0x4, scoped, tag = 'scoped memory for tpu_custom_call.1']
    #allocation17 [shape = 'u8[1024]{0}', space=vmem, size = 0x400, scoped, tag = 'output window, operand 2, single buffered']
    #allocation18 [shape = 'u8[1024]{0}', space=vmem, size = 0x400, scoped, tag = 'output window, operand 3, single buffered']
    #allocation19 [shape = 's32[1]{0}', space=sflag, size = 0x4, scoped, tag = 'scoped memory for tpu_custom_call.1']
    %28 = vsyncpa [#allocation3], 0
    %29 = vsyncpa [#allocation6], 0
    %30 = vsyncpa [#allocation9], 0
    %31 = vsyncpa [#allocation12], 0
    %32 = vsyncpa [#allocation4], 0
    %33 = vsyncpa [#allocation16], 0
    %34 = vsyncpa [#allocation19], 0
    // Predicated region
    $region2: #{tpu_custom_call.1} parent=1 // pred_check
      _
    $region3: #{tpu_custom_call.1} parent=1 // pred_check_branch
      %36 = sbr.rel (0) target = $region5
    $region4: #{tpu_custom_call.1} parent=1 // pred_region
      %s38 = ssub.s32 256, 256
      %39 = vsyncadd [#allocation3], %s38
      %s40 = sshll.u32 [#allocation2], 4
      %s41 = int_to_ptr.vmem [resolvable:$true] %s40
      %46 = dma.hbm_to_vmem [thread:$0]  %s0, 256, %s41, [#allocation3], 128, 128, 8
    $region5: #{tpu_custom_call.1} parent=1 // pred_fallthru
      _
    // Predicated region
    $region6: #{tpu_custom_call.1} parent=1 // pred_check
      _
    $region7: #{tpu_custom_call.1} parent=1 // pred_check_branch
      %48 = sbr.rel (0) target = $region9
    $region8: #{tpu_custom_call.1} parent=1 // pred_region
      %s50 = ssub.s32 256, 256
      %51 = vsyncadd [#allocation6], %s50
      %s52 = sshll.u32 [#allocation5], 4
      %s53 = int_to_ptr.vmem [resolvable:$true] %s52
      %58 = dma.hbm_to_vmem [thread:$0]  %s1, 256, %s53, [#allocation6], 128, 128, 8
    $region9: #{tpu_custom_call.1} parent=1 // pred_fallthru
      _
    // Predicated region
    $region10: #{tpu_custom_call.1} parent=1 // pred_check
      _
    $region11: #{tpu_custom_call.1} parent=1 // pred_check_branch
      %60 = sbr.rel (0) target = $region13
    $region12: #{tpu_custom_call.1} parent=1 // pred_region
      %s62 = ssub.s32 32, 32
      %63 = vsyncadd [#allocation6], %s62
      %s65 = sshll.u32 [#allocation7], 4
      %s66 = int_to_ptr.vmem [resolvable:$true] %s65
      %68 = dma.hbm_to_vmem [thread:$0]  %s2, 32, %s66, [#allocation6]
    $region13: #{tpu_custom_call.1} parent=1 // pred_fallthru
      _
    // Predicated region
    $region14: #{tpu_custom_call.1} parent=1 // pred_check
      _
    $region15: #{tpu_custom_call.1} parent=1 // pred_check_branch
      %70 = sbr.rel (0) target = $region17
    $region16: #{tpu_custom_call.1} parent=1 // pred_region
      _
    $region17: #{tpu_custom_call.1} parent=1 // pred_fallthru
      _
    // Predicated region
    $region18: #{tpu_custom_call.1} parent=1 // pred_check
      _
    $region19: #{tpu_custom_call.1} parent=1 // pred_check_branch
      %72 = sbr.rel (0) target = $region21
    $region20: #{tpu_custom_call.1} parent=1 // pred_region
      %s74 = ssub.s32 16, 16
      %75 = vsyncadd [#allocation9], %s74
      %s77 = sshll.u32 [#allocation8], 4
      %s78 = int_to_ptr.vmem [resolvable:$true] %s77
      %80 = dma.hbm_to_vmem [thread:$0]  %s4, 16, %s78, [#allocation9]
    $region21: #{tpu_custom_call.1} parent=1 // pred_fallthru
      _
    // Predicated region
    $region22: #{tpu_custom_call.1} parent=1 // pred_check
      _
    $region23: #{tpu_custom_call.1} parent=1 // pred_check_branch
      %82 = sbr.rel (0) target = $region25
    $region24: #{tpu_custom_call.1} parent=1 // pred_region
      _
    $region25: #{tpu_custom_call.1} parent=1 // pred_fallthru
      _
    // Predicated region
    $region26: #{tpu_custom_call.1} parent=1 // pred_check
      _
    $region27: #{tpu_custom_call.1} parent=1 // pred_check_branch
      %84 = sbr.rel (0) target = $region29
    $region28: #{tpu_custom_call.1} parent=1 // pred_region
      %s86 = ssub.s32 16, 16
      %87 = vsyncadd [#allocation9], %s86
      %s89 = sshll.u32 [#allocation10], 4
      %s90 = int_to_ptr.vmem [resolvable:$true] %s89
      %92 = dma.hbm_to_vmem [thread:$0]  %s6, 16, %s90, [#allocation9]
    $region29: #{tpu_custom_call.1} parent=1 // pred_fallthru
      _
    // Predicated region
    $region30: #{tpu_custom_call.1} parent=1 // pred_check
      _
    $region31: #{tpu_custom_call.1} parent=1 // pred_check_branch
      %94 = sbr.rel (0) target = $region33
    $region32: #{tpu_custom_call.1} parent=1 // pred_region
      %s96 = ssub.s32 16, 16
      %97 = vsyncadd [#allocation12], %s96
      %s99 = sshll.u32 [#allocation11], 4
      %s100 = int_to_ptr.vmem [resolvable:$true] %s99
      %102 = dma.hbm_to_vmem [thread:$0]  %s7, 16, %s100, [#allocation12]
    $region33: #{tpu_custom_call.1} parent=1 // pred_fallthru
      _
    // Predicated region
    $region34: #{tpu_custom_call.1} parent=1 // pred_check
      _
    $region35: #{tpu_custom_call.1} parent=1 // pred_check_branch
      %104 = sbr.rel (0) target = $region37
    $region36: #{tpu_custom_call.1} parent=1 // pred_region
      %s106 = ssub.s32 16, 16
      %107 = vsyncadd [#allocation12], %s106
      %s109 = sshll.u32 [#allocation13], 4
      %s110 = int_to_ptr.vmem [resolvable:$true] %s109
      %112 = dma.hbm_to_vmem [thread:$0]  %s8, 16, %s110, [#allocation12]
    $region37: #{tpu_custom_call.1} parent=1 // pred_fallthru
      _
    // Predicated region
    $region38: #{tpu_custom_call.1} parent=1 // pred_check
      _
    $region39: #{tpu_custom_call.1} parent=1 // pred_check_branch
      %114 = sbr.rel (0) target = $region41
    $region40: #{tpu_custom_call.1} parent=1 // pred_region
      _
    $region41: #{tpu_custom_call.1} parent=1 // pred_fallthru
      _
    // Predicated region
    $region42: #{tpu_custom_call.1} parent=1 // pred_check
      _
    $region43: #{tpu_custom_call.1} parent=1 // pred_check_branch
      %116 = sbr.rel (0) target = $region45
    $region44: #{tpu_custom_call.1} parent=1 // pred_region
      _
    $region45: #{tpu_custom_call.1} parent=1 // pred_fallthru
      _
    // Predicated region
    $region46: #{tpu_custom_call.1} parent=1 // pred_check
      _
    $region47: #{tpu_custom_call.1} parent=1 // pred_check_branch
      %118 = sbr.rel (0) target = $region49
    $region48: #{tpu_custom_call.1} parent=1 // pred_region
      _
    $region49: #{tpu_custom_call.1} parent=1 // pred_fallthru
      _
    // Predicated region
    $region50: #{tpu_custom_call.1} parent=1 // pred_check
      _
    $region51: #{tpu_custom_call.1} parent=1 // pred_check_branch
      %120 = sbr.rel (0) target = $region53
    $region52: #{tpu_custom_call.1} parent=1 // pred_region
      _
    $region53: #{tpu_custom_call.1} parent=1 // pred_fallthru
      _
    // Predicated region
    $region54: #{tpu_custom_call.1} parent=1 // pred_check
      _
    $region55: #{tpu_custom_call.1} parent=1 // pred_check_branch
      %122 = sbr.rel (0) target = $region57
    $region56: #{tpu_custom_call.1} parent=1 // pred_region
      _
    $region57: #{tpu_custom_call.1} parent=1 // pred_fallthru
      _
    // Predicated region
    $region58: #{tpu_custom_call.1} parent=1 // pred_check
      _
    $region59: #{tpu_custom_call.1} parent=1 // pred_check_branch
      %124 = sbr.rel (0) target = $region61
    $region60: #{tpu_custom_call.1} parent=1 // pred_region
      _
    $region61: #{tpu_custom_call.1} parent=1 // pred_fallthru
      _
    // Predicated region
    $region62: #{tpu_custom_call.1} parent=1 // pred_check
      _
    $region63: #{tpu_custom_call.1} parent=1 // pred_check_branch
      %126 = sbr.rel (0) target = $region65
    $region64: #{tpu_custom_call.1} parent=1 // pred_region
      _
    $region65: #{tpu_custom_call.1} parent=1 // pred_fallthru
      _
    // Predicated region
    $region66: #{tpu_custom_call.1} parent=1 // pred_check
      _
    $region67: #{tpu_custom_call.1} parent=1 // pred_check_branch
      %128 = sbr.rel (0) target = $region69
    $region68: #{tpu_custom_call.1} parent=1 // pred_region
      _
    $region69: #{tpu_custom_call.1} parent=1 // pred_fallthru
      _
    // Predicated region
    $region70: #{tpu_custom_call.1} parent=1 // pred_check
      _
    $region71: #{tpu_custom_call.1} parent=1 // pred_check_branch
      %130 = sbr.rel (0) target = $region73
    $region72: #{tpu_custom_call.1} parent=1 // pred_region
      _
    $region73: #{tpu_custom_call.1} parent=1 // pred_fallthru
      _
    // Predicated region
    $region74: #{tpu_custom_call.1} parent=1 // pred_check
      _
    $region75: #{tpu_custom_call.1} parent=1 // pred_check_branch
      %132 = sbr.rel (0) target = $region77
    $region76: #{tpu_custom_call.1} parent=1 // pred_region
      _
    $region77: #{tpu_custom_call.1} parent=1 // pred_fallthru
      _
    // Predicated region
    $region78: #{tpu_custom_call.1} parent=1 // pred_check
      _
    $region79: #{tpu_custom_call.1} parent=1 // pred_check_branch
      %134 = sbr.rel (0) target = $region81
    $region80: #{tpu_custom_call.1} parent=1 // pred_region
      %135 = dma.done [#allocation3], 256
    $region81: #{tpu_custom_call.1} parent=1 // pred_fallthru
      _
    // Predicated region
    $region82: #{tpu_custom_call.1} parent=1 // pred_check
      _
    $region83: #{tpu_custom_call.1} parent=1 // pred_check_branch
      %137 = sbr.rel (0) target = $region85
    $region84: #{tpu_custom_call.1} parent=1 // pred_region
      %138 = dma.done [#allocation6], 256
    $region85: #{tpu_custom_call.1} parent=1 // pred_fallthru
      _
    // Predicated region
    $region86: #{tpu_custom_call.1} parent=1 // pred_check
      _
    $region87: #{tpu_custom_call.1} parent=1 // pred_check_branch
      %140 = sbr.rel (0) target = $region89
    $region88: #{tpu_custom_call.1} parent=1 // pred_region
      %141 = dma.done [#allocation6], 32
    $region89: #{tpu_custom_call.1} parent=1 // pred_fallthru
      _
    // Predicated region
    $region90: #{tpu_custom_call.1} parent=1 // pred_check
      _
    $region91: #{tpu_custom_call.1} parent=1 // pred_check_branch
      %143 = sbr.rel (0) target = $region93
    $region92: #{tpu_custom_call.1} parent=1 // pred_region
      %144 = dma.done [#allocation9], 16
    $region93: #{tpu_custom_call.1} parent=1 // pred_fallthru
      _
    // Predicated region
    $region94: #{tpu_custom_call.1} parent=1 // pred_check
      _
    $region95: #{tpu_custom_call.1} parent=1 // pred_check_branch
      %146 = sbr.rel (0) target = $region97
    $region96: #{tpu_custom_call.1} parent=1 // pred_region
      %147 = dma.done [#allocation9], 16
    $region97: #{tpu_custom_call.1} parent=1 // pred_fallthru
      _
    // Predicated region
    $region98: #{tpu_custom_call.1} parent=1 // pred_check
      _
    $region99: #{tpu_custom_call.1} parent=1 // pred_check_branch
      %149 = sbr.rel (0) target = $region101
    $region100: #{tpu_custom_call.1} parent=1 // pred_region
      %150 = dma.done [#allocation12], 16
    $region101: #{tpu_custom_call.1} parent=1 // pred_fallthru
      _
    // Predicated region
    $region102: #{tpu_custom_call.1} parent=1 // pred_check
      _
    $region103: #{tpu_custom_call.1} parent=1 // pred_check_branch
      %152 = sbr.rel (0) target = $region105
    $region104: #{tpu_custom_call.1} parent=1 // pred_region
      %153 = dma.done [#allocation12], 16
    $region105: #{tpu_custom_call.1} parent=1 // pred_fallthru
      _
    %v154 = vld [vmem:[#allocation2] sm:$0xff]
    %v155 = vld [vmem:[#allocation2 + $0x8] sm:$0xff]
    %v156 = vld [vmem:[#allocation5] sm:$0xff]
    %v157 = vld [vmem:[#allocation5 + $0x8] sm:$0xff]
    %v158 = vld [vmem:[%s3] sm:$0xff]
    %v159 = vld [vmem:[%s3 + $0x8] sm:$0xff]
    %v160 = vld [vmem:[%s3 + $0x10] sm:$0xff]
    %v161 = vld [vmem:[%s3 + $0x18] sm:$0xff]
    %v162 = vld [vmem:[#allocation8] sm:$0x1]
    %v164 = vlaneseq
    %v165 = vshrl.u32 %v164, 7
    %v166 = vsub.s32 0, %v165
    %v167 = vrot.slane %v162, %v166
    %vm169 = vcmask 261120
    %v171 = vsel %vm169, %v154, 0
    %v174 = vsel %vm169, %v155, 0
    %176 = vmatprep.subr.mxu0 0.0
    %177 = vmatpush1.msra.mxu0 %v158
    %178 = vmatprep.subr.mxu0 0.0
    %179 = vmatpush1.msra.mxu0 %v159
    %180 = vmatprep.subr.mxu0 0.0
    %181 = vmatpush1.msra.mxu0 %v160
    %182 = vmatprep.subr.mxu0 0.0
    %183 = vmatpush1.msra.mxu0 %v161
    %184 = vmatprep.subr.mxu0 0.0
    %185 = vmatpush1.msra.mxu0 0.0
    %186 = vmatprep.subr.mxu0 0.0
    %187 = vmatpush1.msra.mxu0 0.0
    %188 = vmatprep.subr.mxu0 0.0
    %189 = vmatpush1.msra.mxu0 0.0
    %190 = vmatprep.subr.mxu0 0.0
    %191 = vmatpush1.msra.mxu0 0.0
    %192 = vmatprep.subr.mxu0 0.0
    %193 = vmatpush1.msra.mxu0 0.0
    %194 = vmatprep.subr.mxu0 0.0
    %195 = vmatpush1.msra.mxu0 0.0
    %196 = vmatprep.subr.mxu0 0.0
    %197 = vmatpush1.msra.mxu0 0.0
    %198 = vmatprep.subr.mxu0 0.0
    %199 = vmatpush1.msra.mxu0 0.0
    %200 = vmatprep.subr.mxu0 0.0
    %201 = vmatpush1.msra.mxu0 0.0
    %202 = vmatprep.subr.mxu0 0.0
    %203 = vmatpush1.msra.mxu0 0.0
    %204 = vmatprep.subr.mxu0 0.0
    %205 = vmatpush1.msra.mxu0 0.0
    %206 = vmatprep.subr.mxu0 0.0
    %207 = vmatpush1.msra.mxu0 0.0
    %208 = vmatprep.subr.mxu0 0.0
    %209 = vmatpush1.msra.mxu0 0.0
    %210 = vmatprep.subr.mxu0 0.0
    %211 = vmatpush1.msra.mxu0 0.0
    %212 = vmatprep.subr.mxu0 0.0
    %213 = vmatpush1.msra.mxu0 0.0
    %214 = vmatprep.subr.mxu0 0.0
    %215 = vmatpush1.msra.mxu0 0.0
    %216 = vmatprep.subr.mxu0 0.0
    %217 = vmatpush1.msra.mxu0 0.0
    %218 = vmatprep.subr.mxu0 0.0
    %219 = vmatpush1.msra.mxu0 0.0
    %220 = vmatprep.subr.mxu0 0.0
    %221 = vmatpush1.msra.mxu0 0.0
    %222 = vmatprep.subr.mxu0 0.0
    %223 = vmatpush1.msra.mxu0 0.0
    %224 = vmatprep.subr.mxu0 0.0
    %225 = vmatpush1.msra.mxu0 0.0
    %226 = vmatprep.subr.mxu0 0.0
    %227 = vmatpush1.msra.mxu0 0.0
    %228 = vmatprep.subr.mxu0 0.0
    %229 = vmatpush1.msra.mxu0 0.0
    %230 = vmatprep.subr.mxu0 0.0
    %231 = vmatpush1.msra.mxu0 0.0
    %232 = vmatprep.subr.mxu0 0.0
    %233 = vmatpush1.msra.mxu0 0.0
    %234 = vmatprep.subr.mxu0 0.0
    %235 = vmatpush1.msra.mxu0 0.0
    %236 = vmatprep.subr.mxu0 0.0
    %237 = vmatpush1.msra.mxu0 0.0
    %238 = vmatprep.subr.mxu0 0.0
    %239 = vmatpush1.msra.mxu0 0.0
    %240 = vmatprep.mubr.f32.mxu0 0.0
    %241 = vmatmul.mubr.f32.gmra.mrb[0].mxu0 %v171
    %v242 = vpop.f32.mrb[0].mxu0
    %v243 = vadd.f32 %v167, %v242
    %v244 = vpop.f32.mrb[0].mxu0
    %245 = vmatprep.mubr.f32.mxu0 0.0
    %246 = vmatmul.mubr.f32.gmra.mrb[0].mxu0 %v174
    %v247 = vpop.f32.mrb[0].mxu0
    %v248 = vadd.f32 %v167, %v247
    %v249 = vpop.f32.mrb[0].mxu0
    %250 = vdwg.mxu0
    %253 = vrot.lane.b32.xlu0 %v243, 96
    %v254 = vpop.permute.xlu0 %253
    %255 = vrot.lane.b32.xlu0 %v248, 96
    %v256 = vpop.permute.xlu0 %255
    %vm257 = vcmask 130048
    %v258 = vsel %vm257, %v243, 0
    %v260 = vsel %vm257, %v248, 0
    %v262 = vsel %vm257, %v254, 0
    %v264 = vsel %vm257, %v256, 0
    %266 = vmatprep.subr.mxu0 0.0
    %267 = vmatpush1.xpose.msra.mxu0 %v262
    %268 = vmatprep.subr.mxu0 0.0
    %269 = vmatpush1.xpose.msra.mxu0 %v264
    %270 = vmatprep.subr.mxu0 0.0
    %271 = vmatpush1.xpose.msra.mxu0 0.0
    %272 = vmatprep.subr.mxu0 0.0
    %273 = vmatpush1.xpose.msra.mxu0 0.0
    %274 = vmatprep.subr.mxu0 0.0
    %275 = vmatpush1.xpose.msra.mxu0 0.0
    %276 = vmatprep.subr.mxu0 0.0
    %277 = vmatpush1.xpose.msra.mxu0 0.0
    %278 = vmatprep.subr.mxu0 0.0
    %279 = vmatpush1.xpose.msra.mxu0 0.0
    %280 = vmatprep.subr.mxu0 0.0
    %281 = vmatpush1.xpose.msra.mxu0 0.0
    %282 = vmatprep.subr.mxu0 0.0
    %283 = vmatpush1.xpose.msra.mxu0 0.0
    %284 = vmatprep.subr.mxu0 0.0
    %285 = vmatpush1.xpose.msra.mxu0 0.0
    %286 = vmatprep.subr.mxu0 0.0
    %287 = vmatpush1.xpose.msra.mxu0 0.0
    %288 = vmatprep.subr.mxu0 0.0
    %289 = vmatpush1.xpose.msra.mxu0 0.0
    %290 = vmatprep.subr.mxu0 0.0
    %291 = vmatpush1.xpose.msra.mxu0 0.0
    %292 = vmatprep.subr.mxu0 0.0
    %293 = vmatpush1.xpose.msra.mxu0 0.0
    %294 = vmatprep.subr.mxu0 0.0
    %295 = vmatpush1.xpose.msra.mxu0 0.0
    %296 = vmatprep.subr.mxu0 0.0
    %297 = vmatpush1.xpose.msra.mxu0 0.0
    %298 = vmatprep.subr.mxu0 0.0
    %299 = vmatpush1.xpose.msra.mxu0 0.0
    %300 = vmatprep.subr.mxu0 0.0
    %301 = vmatpush1.xpose.msra.mxu0 0.0
    %302 = vmatprep.subr.mxu0 0.0
    %303 = vmatpush1.xpose.msra.mxu0 0.0
    %304 = vmatprep.subr.mxu0 0.0
    %305 = vmatpush1.xpose.msra.mxu0 0.0
    %306 = vmatprep.subr.mxu0 0.0
    %307 = vmatpush1.xpose.msra.mxu0 0.0
    %308 = vmatprep.subr.mxu0 0.0
    %309 = vmatpush1.xpose.msra.mxu0 0.0
    %310 = vmatprep.subr.mxu0 0.0
    %311 = vmatpush1.xpose.msra.mxu0 0.0
    %312 = vmatprep.subr.mxu0 0.0
    %313 = vmatpush1.xpose.msra.mxu0 0.0
    %314 = vmatprep.subr.mxu0 0.0
    %315 = vmatpush1.xpose.msra.mxu0 0.0
    %316 = vmatprep.subr.mxu0 0.0
    %317 = vmatpush1.xpose.msra.mxu0 0.0
    %318 = vmatprep.subr.mxu0 0.0
    %319 = vmatpush1.xpose.msra.mxu0 0.0
    %320 = vmatprep.subr.mxu0 0.0
    %321 = vmatpush1.xpose.msra.mxu0 0.0
    %322 = vmatprep.subr.mxu0 0.0
    %323 = vmatpush1.xpose.msra.mxu0 0.0
    %324 = vmatprep.subr.mxu0 0.0
    %325 = vmatpush1.xpose.msra.mxu0 0.0
    %326 = vmatprep.subr.mxu0 0.0
    %327 = vmatpush1.xpose.msra.mxu0 0.0
    %328 = vmatprep.subr.mxu0 0.0
    %329 = vmatpush1.xpose.msra.mxu0 0.0
    %330 = vmatprep.mubr.f32.mxu0 0.0
    %331 = vmatmul.mubr.f32.gmra.mrb[0].mxu0 %v258
    %v332 = vpop.f32.mrb[0].mxu0
    %v333 = vadd.f32 0.0, %v332
    %v334 = vpop.f32.mrb[0].mxu0
    %335 = vmatprep.mubr.f32.mxu0 0.0
    %336 = vmatmul.mubr.f32.gmra.mrb[0].mxu0 %v260
    %v337 = vpop.f32.mrb[0].mxu0
    %v338 = vadd.f32 0.0, %v337
    %v339 = vpop.f32.mrb[0].mxu0
    %340 = vdwg.mxu0
    %v341 = vmul.f32 %v333, 0.25
    %v342 = vmul.f32 %v338, 0.25
    %v343 = vadd.f32 %v341, %v156
    %v344 = vadd.f32 %v342, %v157
    %v345 = vsel %vm257, %v343, -inf
    %346 = vmax.xlane.f32.xlu0 %v345
    %v347 = vpop.xlane.xlu0 %346
    %v348 = vsel %vm257, %v344, -inf
    %349 = vmax.xlane.f32.xlu0 %v348
    %v350 = vpop.xlane.xlu0 %349
    %v351 = vsub.f32 %v343, %v347
    %v352 = vsub.f32 %v344, %v350
    %v353 = vmul.f32 %v351, 1.442695
    %v354 = vpow.pop %v353
    %v355 = vmul.f32 %v352, 1.442695
    %v356 = vpow.pop %v355
    %v357 = vsel %vm257, %v354, 0.0
    %358 = vadd.xlane.f32.xlu0 %v357
    %v359 = vpop.xlane.xlu0 %358
    %v360 = vsel %vm257, %v356, 0.0
    %361 = vadd.xlane.f32.xlu0 %v360
    %v362 = vpop.xlane.xlu0 %361
    %v363 = vrcp.pop %v359
    %v364 = vrcp.pop %v362
    %v365 = vmul.f32 %v354, %v363
    %v366 = vmul.f32 %v356, %v364
    %367 = vst.msk [vmem:[#allocation14] sm:$0xff] %vm257, %v365
    %368 = vst.msk [vmem:[#allocation14 + $0x8] sm:$0xff] %vm257, %v366
    %369 = vrot.lane.b32.xlu0 %v243, 64
    %v370 = vpop.permute.xlu0 %369
    %371 = vrot.lane.b32.xlu0 %v248, 64
    %v372 = vpop.permute.xlu0 %371
    %v376 = vsel %vm257, %v365, 0
    %v379 = vsel %vm257, %v366, 0
    %381 = vmatprep.subr.mxu0 0.0
    %382 = vmatpush1.msra.mxu0 %v370
    %383 = vmatprep.subr.mxu0 0.0
    %384 = vmatpush1.msra.mxu0 %v372
    %385 = vmatprep.subr.mxu0 0.0
    %386 = vmatpush1.msra.mxu0 0.0
    %387 = vmatprep.subr.mxu0 0.0
    %388 = vmatpush1.msra.mxu0 0.0
    %389 = vmatprep.subr.mxu0 0.0
    %390 = vmatpush1.msra.mxu0 0.0
    %391 = vmatprep.subr.mxu0 0.0
    %392 = vmatpush1.msra.mxu0 0.0
    %393 = vmatprep.subr.mxu0 0.0
    %394 = vmatpush1.msra.mxu0 0.0
    %395 = vmatprep.subr.mxu0 0.0
    %396 = vmatpush1.msra.mxu0 0.0
    %397 = vmatprep.subr.mxu0 0.0
    %398 = vmatpush1.msra.mxu0 0.0
    %399 = vmatprep.subr.mxu0 0.0
    %400 = vmatpush1.msra.mxu0 0.0
    %401 = vmatprep.subr.mxu0 0.0
    %402 = vmatpush1.msra.mxu0 0.0
    %403 = vmatprep.subr.mxu0 0.0
    %404 = vmatpush1.msra.mxu0 0.0
    %405 = vmatprep.subr.mxu0 0.0
    %406 = vmatpush1.msra.mxu0 0.0
    %407 = vmatprep.subr.mxu0 0.0
    %408 = vmatpush1.msra.mxu0 0.0
    %409 = vmatprep.subr.mxu0 0.0
    %410 = vmatpush1.msra.mxu0 0.0
    %411 = vmatprep.subr.mxu0 0.0
    %412 = vmatpush1.msra.mxu0 0.0
    %413 = vmatprep.subr.mxu0 0.0
    %414 = vmatpush1.msra.mxu0 0.0
    %415 = vmatprep.subr.mxu0 0.0
    %416 = vmatpush1.msra.mxu0 0.0
    %417 = vmatprep.subr.mxu0 0.0
    %418 = vmatpush1.msra.mxu0 0.0
    %419 = vmatprep.subr.mxu0 0.0
    %420 = vmatpush1.msra.mxu0 0.0
    %421 = vmatprep.subr.mxu0 0.0
    %422 = vmatpush1.msra.mxu0 0.0
    %423 = vmatprep.subr.mxu0 0.0
    %424 = vmatpush1.msra.mxu0 0.0
    %425 = vmatprep.subr.mxu0 0.0
    %426 = vmatpush1.msra.mxu0 0.0
    %427 = vmatprep.subr.mxu0 0.0
    %428 = vmatpush1.msra.mxu0 0.0
    %429 = vmatprep.subr.mxu0 0.0
    %430 = vmatpush1.msra.mxu0 0.0
    %431 = vmatprep.subr.mxu0 0.0
    %432 = vmatpush1.msra.mxu0 0.0
    %433 = vmatprep.subr.mxu0 0.0
    %434 = vmatpush1.msra.mxu0 0.0
    %435 = vmatprep.subr.mxu0 0.0
    %436 = vmatpush1.msra.mxu0 0.0
    %437 = vmatprep.subr.mxu0 0.0
    %438 = vmatpush1.msra.mxu0 0.0
    %439 = vmatprep.subr.mxu0 0.0
    %440 = vmatpush1.msra.mxu0 0.0
    %441 = vmatprep.subr.mxu0 0.0
    %442 = vmatpush1.msra.mxu0 0.0
    %443 = vmatprep.subr.mxu0 0.0
    %444 = vmatpush1.msra.mxu0 0.0
    %445 = vmatprep.mubr.f32.mxu0 0.0
    %446 = vmatmul.mubr.f32.gmra.mrb[0].mxu0 %v376
    %v447 = vpop.f32.mrb[0].mxu0
    %v448 = vadd.f32 0.0, %v447
    %v449 = vpop.f32.mrb[0].mxu0
    %450 = vmatprep.mubr.f32.mxu0 0.0
    %451 = vmatmul.mubr.f32.gmra.mrb[0].mxu0 %v379
    %v452 = vpop.f32.mrb[0].mxu0
    %v453 = vadd.f32 0.0, %v452
    %v454 = vpop.f32.mrb[0].mxu0
    %455 = vdwg.mxu0
    %v456 = vld [vmem:[%s5] sm:$0xff]
    %v457 = vld [vmem:[%s5 + $0x8] sm:$0xff]
    %458 = vrot.lane.b32.xlu0 %v243, 112
    %v459 = vpop.permute.xlu0 %458
    %460 = vrot.lane.b32.xlu0 %v248, 112
    %v461 = vpop.permute.xlu0 %460
    %462 = vrot.lane.b32.xlu0 %v243, 80
    %v463 = vpop.permute.xlu0 %462
    %464 = vrot.lane.b32.xlu0 %v248, 80
    %v465 = vpop.permute.xlu0 %464
    %v466 = vsel %vm257, %v459, 0
    %v468 = vsel %vm257, %v461, 0
    %v470 = vsel %vm257, %v463, 0
    %v472 = vsel %vm257, %v465, 0
    %474 = vmatprep.subr.mxu0 0.0
    %475 = vmatpush1.xpose.msra.mxu0 %v470
    %476 = vmatprep.subr.mxu0 0.0
    %477 = vmatpush1.xpose.msra.mxu0 %v472
    %478 = vmatprep.subr.mxu0 0.0
    %479 = vmatpush1.xpose.msra.mxu0 0.0
    %480 = vmatprep.subr.mxu0 0.0
    %481 = vmatpush1.xpose.msra.mxu0 0.0
    %482 = vmatprep.subr.mxu0 0.0
    %483 = vmatpush1.xpose.msra.mxu0 0.0
    %484 = vmatprep.subr.mxu0 0.0
    %485 = vmatpush1.xpose.msra.mxu0 0.0
    %486 = vmatprep.subr.mxu0 0.0
    %487 = vmatpush1.xpose.msra.mxu0 0.0
    %488 = vmatprep.subr.mxu0 0.0
    %489 = vmatpush1.xpose.msra.mxu0 0.0
    %490 = vmatprep.subr.mxu0 0.0
    %491 = vmatpush1.xpose.msra.mxu0 0.0
    %492 = vmatprep.subr.mxu0 0.0
    %493 = vmatpush1.xpose.msra.mxu0 0.0
    %494 = vmatprep.subr.mxu0 0.0
    %495 = vmatpush1.xpose.msra.mxu0 0.0
    %496 = vmatprep.subr.mxu0 0.0
    %497 = vmatpush1.xpose.msra.mxu0 0.0
    %498 = vmatprep.subr.mxu0 0.0
    %499 = vmatpush1.xpose.msra.mxu0 0.0
    %500 = vmatprep.subr.mxu0 0.0
    %501 = vmatpush1.xpose.msra.mxu0 0.0
    %502 = vmatprep.subr.mxu0 0.0
    %503 = vmatpush1.xpose.msra.mxu0 0.0
    %504 = vmatprep.subr.mxu0 0.0
    %505 = vmatpush1.xpose.msra.mxu0 0.0
    %506 = vmatprep.subr.mxu0 0.0
    %507 = vmatpush1.xpose.msra.mxu0 0.0
    %508 = vmatprep.subr.mxu0 0.0
    %509 = vmatpush1.xpose.msra.mxu0 0.0
    %510 = vmatprep.subr.mxu0 0.0
    %511 = vmatpush1.xpose.msra.mxu0 0.0
    %512 = vmatprep.subr.mxu0 0.0
    %513 = vmatpush1.xpose.msra.mxu0 0.0
    %514 = vmatprep.subr.mxu0 0.0
    %515 = vmatpush1.xpose.msra.mxu0 0.0
    %516 = vmatprep.subr.mxu0 0.0
    %517 = vmatpush1.xpose.msra.mxu0 0.0
    %518 = vmatprep.subr.mxu0 0.0
    %519 = vmatpush1.xpose.msra.mxu0 0.0
    %520 = vmatprep.subr.mxu0 0.0
    %521 = vmatpush1.xpose.msra.mxu0 0.0
    %522 = vmatprep.subr.mxu0 0.0
    %523 = vmatpush1.xpose.msra.mxu0 0.0
    %524 = vmatprep.subr.mxu0 0.0
    %525 = vmatpush1.xpose.msra.mxu0 0.0
    %526 = vmatprep.subr.mxu0 0.0
    %527 = vmatpush1.xpose.msra.mxu0 0.0
    %528 = vmatprep.subr.mxu0 0.0
    %529 = vmatpush1.xpose.msra.mxu0 0.0
    %530 = vmatprep.subr.mxu0 0.0
    %531 = vmatpush1.xpose.msra.mxu0 0.0
    %532 = vmatprep.subr.mxu0 0.0
    %533 = vmatpush1.xpose.msra.mxu0 0.0
    %534 = vmatprep.subr.mxu0 0.0
    %535 = vmatpush1.xpose.msra.mxu0 0.0
    %536 = vmatprep.subr.mxu0 0.0
    %537 = vmatpush1.xpose.msra.mxu0 0.0
    %538 = vmatprep.mubr.f32.mxu0 0.0
    %539 = vmatmul.mubr.f32.gmra.mrb[0].mxu0 %v466
    %v540 = vpop.f32.mrb[0].mxu0
    %v541 = vadd.f32 0.0, %v540
    %v542 = vpop.f32.mrb[0].mxu0
    %543 = vmatprep.mubr.f32.mxu0 0.0
    %544 = vmatmul.mubr.f32.gmra.mrb[0].mxu0 %v468
    %v545 = vpop.f32.mrb[0].mxu0
    %v546 = vadd.f32 0.0, %v545
    %v547 = vpop.f32.mrb[0].mxu0
    %548 = vdwg.mxu0
    %v549 = vmul.f32 %v541, 0.25
    %v550 = vmul.f32 %v546, 0.25
    %v551 = vadd.f32 %v549, %v156
    %v552 = vadd.f32 %v550, %v157
    %v553 = vsel %vm257, %v551, -inf
    %554 = vmax.xlane.f32.xlu0 %v553
    %v555 = vpop.xlane.xlu0 %554
    %v556 = vsel %vm257, %v552, -inf
    %557 = vmax.xlane.f32.xlu0 %v556
    %v558 = vpop.xlane.xlu0 %557
    %v559 = vsub.f32 %v551, %v555
    %v560 = vsub.f32 %v552, %v558
    %v561 = vmul.f32 %v559, 1.442695
    %v562 = vpow.pop %v561
    %v563 = vmul.f32 %v560, 1.442695
    %v564 = vpow.pop %v563
    %v565 = vsel %vm257, %v562, 0.0
    %566 = vadd.xlane.f32.xlu0 %v565
    %v567 = vpop.xlane.xlu0 %566
    %v568 = vsel %vm257, %v564, 0.0
    %569 = vadd.xlane.f32.xlu0 %v568
    %v570 = vpop.xlane.xlu0 %569
    %v571 = vrcp.pop %v567
    %v572 = vrcp.pop %v570
    %v573 = vmul.f32 %v562, %v571
    %v574 = vmul.f32 %v564, %v572
    %s575 = scalar_lea.vmem [#allocation14], 16
    %576 = vst.msk [vmem:[%s575] sm:$0xff] %vm257, %v573
    %577 = vst.msk [vmem:[%s575 + $0x8] sm:$0xff] %vm257, %v574
    %578 = vrot.lane.b32.xlu0 %v243, 48
    %v579 = vpop.permute.xlu0 %578
    %580 = vrot.lane.b32.xlu0 %v248, 48
    %v581 = vpop.permute.xlu0 %580
    %v585 = vsel %vm257, %v573, 0
    %v588 = vsel %vm257, %v574, 0
    %590 = vmatprep.subr.mxu0 0.0
    %591 = vmatpush1.msra.mxu0 %v579
    %592 = vmatprep.subr.mxu0 0.0
    %593 = vmatpush1.msra.mxu0 %v581
    %594 = vmatprep.subr.mxu0 0.0
    %595 = vmatpush1.msra.mxu0 0.0
    %596 = vmatprep.subr.mxu0 0.0
    %597 = vmatpush1.msra.mxu0 0.0
    %598 = vmatprep.subr.mxu0 0.0
    %599 = vmatpush1.msra.mxu0 0.0
    %600 = vmatprep.subr.mxu0 0.0
    %601 = vmatpush1.msra.mxu0 0.0
    %602 = vmatprep.subr.mxu0 0.0
    %603 = vmatpush1.msra.mxu0 0.0
    %604 = vmatprep.subr.mxu0 0.0
    %605 = vmatpush1.msra.mxu0 0.0
    %606 = vmatprep.subr.mxu0 0.0
    %607 = vmatpush1.msra.mxu0 0.0
    %608 = vmatprep.subr.mxu0 0.0
    %609 = vmatpush1.msra.mxu0 0.0
    %610 = vmatprep.subr.mxu0 0.0
    %611 = vmatpush1.msra.mxu0 0.0
    %612 = vmatprep.subr.mxu0 0.0
    %613 = vmatpush1.msra.mxu0 0.0
    %614 = vmatprep.subr.mxu0 0.0
    %615 = vmatpush1.msra.mxu0 0.0
    %616 = vmatprep.subr.mxu0 0.0
    %617 = vmatpush1.msra.mxu0 0.0
    %618 = vmatprep.subr.mxu0 0.0
    %619 = vmatpush1.msra.mxu0 0.0
    %620 = vmatprep.subr.mxu0 0.0
    %621 = vmatpush1.msra.mxu0 0.0
    %622 = vmatprep.subr.mxu0 0.0
    %623 = vmatpush1.msra.mxu0 0.0
    %624 = vmatprep.subr.mxu0 0.0
    %625 = vmatpush1.msra.mxu0 0.0
    %626 = vmatprep.subr.mxu0 0.0
    %627 = vmatpush1.msra.mxu0 0.0
    %628 = vmatprep.subr.mxu0 0.0
    %629 = vmatpush1.msra.mxu0 0.0
    %630 = vmatprep.subr.mxu0 0.0
    %631 = vmatpush1.msra.mxu0 0.0
    %632 = vmatprep.subr.mxu0 0.0
    %633 = vmatpush1.msra.mxu0 0.0
    %634 = vmatprep.subr.mxu0 0.0
    %635 = vmatpush1.msra.mxu0 0.0
    %636 = vmatprep.subr.mxu0 0.0
    %637 = vmatpush1.msra.mxu0 0.0
    %638 = vmatprep.subr.mxu0 0.0
    %639 = vmatpush1.msra.mxu0 0.0
    %640 = vmatprep.subr.mxu0 0.0
    %641 = vmatpush1.msra.mxu0 0.0
    %642 = vmatprep.subr.mxu0 0.0
    %643 = vmatpush1.msra.mxu0 0.0
    %644 = vmatprep.subr.mxu0 0.0
    %645 = vmatpush1.msra.mxu0 0.0
    %646 = vmatprep.subr.mxu0 0.0
    %647 = vmatpush1.msra.mxu0 0.0
    %648 = vmatprep.subr.mxu0 0.0
    %649 = vmatpush1.msra.mxu0 0.0
    %650 = vmatprep.subr.mxu0 0.0
    %651 = vmatpush1.msra.mxu0 0.0
    %652 = vmatprep.subr.mxu0 0.0
    %653 = vmatpush1.msra.mxu0 0.0
    %654 = vmatprep.mubr.f32.mxu0 0.0
    %655 = vmatmul.mubr.f32.gmra.mrb[0].mxu0 %v585
    %v656 = vpop.f32.mrb[0].mxu0
    %v657 = vadd.f32 0.0, %v656
    %v658 = vpop.f32.mrb[0].mxu0
    %659 = vmatprep.mubr.f32.mxu0 0.0
    %660 = vmatmul.mubr.f32.gmra.mrb[0].mxu0 %v588
    %v661 = vpop.f32.mrb[0].mxu0
    %v662 = vadd.f32 0.0, %v661
    %v663 = vpop.f32.mrb[0].mxu0
    %664 = vdwg.mxu0
    %v665 = vld [vmem:[%s5 + $0x10] sm:$0xff]
    %v666 = vld [vmem:[%s5 + $0x18] sm:$0xff]
    %v668 = vsel %vm257, %v657, 0
    %v671 = vsel %vm257, %v662, 0
    %673 = vmatprep.subr.mxu0 0.0
    %674 = vmatpush1.msra.mxu0 %v665
    %675 = vmatprep.subr.mxu0 0.0
    %676 = vmatpush1.msra.mxu0 %v666
    %677 = vmatprep.subr.mxu0 0.0
    %678 = vmatpush1.msra.mxu0 0.0
    %679 = vmatprep.subr.mxu0 0.0
    %680 = vmatpush1.msra.mxu0 0.0
    %681 = vmatprep.subr.mxu0 0.0
    %682 = vmatpush1.msra.mxu0 0.0
    %683 = vmatprep.subr.mxu0 0.0
    %684 = vmatpush1.msra.mxu0 0.0
    %685 = vmatprep.subr.mxu0 0.0
    %686 = vmatpush1.msra.mxu0 0.0
    %687 = vmatprep.subr.mxu0 0.0
    %688 = vmatpush1.msra.mxu0 0.0
    %689 = vmatprep.subr.mxu0 0.0
    %690 = vmatpush1.msra.mxu0 0.0
    %691 = vmatprep.subr.mxu0 0.0
    %692 = vmatpush1.msra.mxu0 0.0
    %693 = vmatprep.subr.mxu0 0.0
    %694 = vmatpush1.msra.mxu0 0.0
    %695 = vmatprep.subr.mxu0 0.0
    %696 = vmatpush1.msra.mxu0 0.0
    %697 = vmatprep.subr.mxu0 0.0
    %698 = vmatpush1.msra.mxu0 0.0
    %699 = vmatprep.subr.mxu0 0.0
    %700 = vmatpush1.msra.mxu0 0.0
    %701 = vmatprep.subr.mxu0 0.0
    %702 = vmatpush1.msra.mxu0 0.0
    %703 = vmatprep.subr.mxu0 0.0
    %704 = vmatpush1.msra.mxu0 0.0
    %705 = vmatprep.subr.mxu0 0.0
    %706 = vmatpush1.msra.mxu0 0.0
    %707 = vmatprep.subr.mxu0 0.0
    %708 = vmatpush1.msra.mxu0 0.0
    %709 = vmatprep.subr.mxu0 0.0
    %710 = vmatpush1.msra.mxu0 0.0
    %711 = vmatprep.subr.mxu0 0.0
    %712 = vmatpush1.msra.mxu0 0.0
    %713 = vmatprep.subr.mxu0 0.0
    %714 = vmatpush1.msra.mxu0 0.0
    %715 = vmatprep.subr.mxu0 0.0
    %716 = vmatpush1.msra.mxu0 0.0
    %717 = vmatprep.subr.mxu0 0.0
    %718 = vmatpush1.msra.mxu0 0.0
    %719 = vmatprep.subr.mxu0 0.0
    %720 = vmatpush1.msra.mxu0 0.0
    %721 = vmatprep.subr.mxu0 0.0
    %722 = vmatpush1.msra.mxu0 0.0
    %723 = vmatprep.subr.mxu0 0.0
    %724 = vmatpush1.msra.mxu0 0.0
    %725 = vmatprep.subr.mxu0 0.0
    %726 = vmatpush1.msra.mxu0 0.0
    %727 = vmatprep.subr.mxu0 0.0
    %728 = vmatpush1.msra.mxu0 0.0
    %729 = vmatprep.subr.mxu0 0.0
    %730 = vmatpush1.msra.mxu0 0.0
    %731 = vmatprep.subr.mxu0 0.0
    %732 = vmatpush1.msra.mxu0 0.0
    %733 = vmatprep.subr.mxu0 0.0
    %734 = vmatpush1.msra.mxu0 0.0
    %735 = vmatprep.subr.mxu0 0.0
    %736 = vmatpush1.msra.mxu0 0.0
    %737 = vmatprep.mubr.f32.mxu0 0.0
    %738 = vmatmul.mubr.f32.gmra.mrb[0].mxu0 %v668
    %v739 = vpop.f32.mrb[0].mxu0
    %v740 = vadd.f32 0.0, %v739
    %v741 = vpop.f32.mrb[0].mxu0
    %742 = vmatprep.mubr.f32.mxu0 0.0
    %743 = vmatmul.mubr.f32.gmra.mrb[0].mxu0 %v671
    %v744 = vpop.f32.mrb[0].mxu0
    %v745 = vadd.f32 0.0, %v744
    %v746 = vpop.f32.mrb[0].mxu0
    %747 = vdwg.mxu0
    %v749 = vsel %vm257, %v448, 0
    %v752 = vsel %vm257, %v453, 0
    %754 = vmatprep.subr.mxu0 0.0
    %755 = vmatpush1.msra.mxu0 %v456
    %756 = vmatprep.subr.mxu0 0.0
    %757 = vmatpush1.msra.mxu0 %v457
    %758 = vmatprep.subr.mxu0 0.0
    %759 = vmatpush1.msra.mxu0 0.0
    %760 = vmatprep.subr.mxu0 0.0
    %761 = vmatpush1.msra.mxu0 0.0
    %762 = vmatprep.subr.mxu0 0.0
    %763 = vmatpush1.msra.mxu0 0.0
    %764 = vmatprep.subr.mxu0 0.0
    %765 = vmatpush1.msra.mxu0 0.0
    %766 = vmatprep.subr.mxu0 0.0
    %767 = vmatpush1.msra.mxu0 0.0
    %768 = vmatprep.subr.mxu0 0.0
    %769 = vmatpush1.msra.mxu0 0.0
    %770 = vmatprep.subr.mxu0 0.0
    %771 = vmatpush1.msra.mxu0 0.0
    %772 = vmatprep.subr.mxu0 0.0
    %773 = vmatpush1.msra.mxu0 0.0
    %774 = vmatprep.subr.mxu0 0.0
    %775 = vmatpush1.msra.mxu0 0.0
    %776 = vmatprep.subr.mxu0 0.0
    %777 = vmatpush1.msra.mxu0 0.0
    %778 = vmatprep.subr.mxu0 0.0
    %779 = vmatpush1.msra.mxu0 0.0
    %780 = vmatprep.subr.mxu0 0.0
    %781 = vmatpush1.msra.mxu0 0.0
    %782 = vmatprep.subr.mxu0 0.0
    %783 = vmatpush1.msra.mxu0 0.0
    %784 = vmatprep.subr.mxu0 0.0
    %785 = vmatpush1.msra.mxu0 0.0
    %786 = vmatprep.subr.mxu0 0.0
    %787 = vmatpush1.msra.mxu0 0.0
    %788 = vmatprep.subr.mxu0 0.0
    %789 = vmatpush1.msra.mxu0 0.0
    %790 = vmatprep.subr.mxu0 0.0
    %791 = vmatpush1.msra.mxu0 0.0
    %792 = vmatprep.subr.mxu0 0.0
    %793 = vmatpush1.msra.mxu0 0.0
    %794 = vmatprep.subr.mxu0 0.0
    %795 = vmatpush1.msra.mxu0 0.0
    %796 = vmatprep.subr.mxu0 0.0
    %797 = vmatpush1.msra.mxu0 0.0
    %798 = vmatprep.subr.mxu0 0.0
    %799 = vmatpush1.msra.mxu0 0.0
    %800 = vmatprep.subr.mxu0 0.0
    %801 = vmatpush1.msra.mxu0 0.0
    %802 = vmatprep.subr.mxu0 0.0
    %803 = vmatpush1.msra.mxu0 0.0
    %804 = vmatprep.subr.mxu0 0.0
    %805 = vmatpush1.msra.mxu0 0.0
    %806 = vmatprep.subr.mxu0 0.0
    %807 = vmatpush1.msra.mxu0 0.0
    %808 = vmatprep.subr.mxu0 0.0
    %809 = vmatpush1.msra.mxu0 0.0
    %810 = vmatprep.subr.mxu0 0.0
    %811 = vmatpush1.msra.mxu0 0.0
    %812 = vmatprep.subr.mxu0 0.0
    %813 = vmatpush1.msra.mxu0 0.0
    %814 = vmatprep.subr.mxu0 0.0
    %815 = vmatpush1.msra.mxu0 0.0
    %816 = vmatprep.subr.mxu0 0.0
    %817 = vmatpush1.msra.mxu0 0.0
    %818 = vmatprep.mubr.f32.mxu0 0.0
    %819 = vmatmul.mubr.f32.gmra.mrb[0].mxu0 %v749
    %v820 = vpop.f32.mrb[0].mxu0
    %v821 = vadd.f32 %v740, %v820
    %v822 = vpop.f32.mrb[0].mxu0
    %823 = vmatprep.mubr.f32.mxu0 0.0
    %824 = vmatmul.mubr.f32.gmra.mrb[0].mxu0 %v752
    %v825 = vpop.f32.mrb[0].mxu0
    %v826 = vadd.f32 %v745, %v825
    %v827 = vpop.f32.mrb[0].mxu0
    %828 = vdwg.mxu0
    %v829 = vld [vmem:[#allocation10] sm:$0x1]
    %v831 = vlaneseq
    %v832 = vshrl.u32 %v831, 7
    %v833 = vsub.s32 0, %v832
    %v834 = vrot.slane %v829, %v833
    %v836 = vadd.f32 %v821, %v834
    %v837 = vadd.f32 %v826, %v834
    %v838 = vadd.f32 %v154, %v836
    %v839 = vadd.f32 %v155, %v837
    %v840 = vld [vmem:[#allocation11] sm:$0x1]
    %v841 = vld [vmem:[#allocation13] sm:$0x1]
    %v842 = vsel %vm169, %v838, 0.0
    %843 = vadd.xlane.f32.xlu0 %v842
    %v844 = vpop.xlane.xlu0 %843
    %v845 = vsel %vm169, %v839, 0.0
    %846 = vadd.xlane.f32.xlu0 %v845
    %v847 = vpop.xlane.xlu0 %846
    %v848 = vrcp.pop 32.0
    %v849 = vmul.f32 %v844, %v848
    %v850 = vmul.f32 %v847, %v848
    %v851 = vsub.f32 %v838, %v849
    %v852 = vsub.f32 %v839, %v850
    %v853 = vmul.f32 %v851, %v851
    %v854 = vmul.f32 %v852, %v852
    %v855 = vsel %vm169, %v853, 0.0
    %856 = vadd.xlane.f32.xlu0 %v855
    %v857 = vpop.xlane.xlu0 %856
    %v858 = vsel %vm169, %v854, 0.0
    %859 = vadd.xlane.f32.xlu0 %v858
    %v860 = vpop.xlane.xlu0 %859
    %v861 = vmul.f32 %v857, %v848
    %v862 = vmul.f32 %v860, %v848
    %v863 = vadd.f32 %v861, 1e-12
    %v864 = vadd.f32 %v862, 1e-12
    %v865 = vrsqrt.pop %v863
    %v866 = vrsqrt.pop %v864
    %v867 = vmul.f32 %v851, %v865
    %v868 = vmul.f32 %v852, %v866
    %v870 = vlaneseq
    %v871 = vshrl.u32 %v870, 7
    %v872 = vsub.s32 0, %v871
    %v873 = vrot.slane %v840, %v872
    %v875 = vmul.f32 %v867, %v873
    %v876 = vmul.f32 %v868, %v873
    %v878 = vlaneseq
    %v879 = vshrl.u32 %v878, 7
    %v880 = vsub.s32 0, %v879
    %v881 = vrot.slane %v841, %v880
    %v883 = vadd.f32 %v875, %v881
    %v884 = vadd.f32 %v876, %v881
    %v885 = vld [vmem:[%s9] sm:$0xff]
    %v886 = vld [vmem:[%s9 + $0x8] sm:$0xff]
    %v887 = vld [vmem:[%s9 + $0x10] sm:$0xff]
    %v888 = vld [vmem:[%s9 + $0x18] sm:$0xff]
    %v889 = vld [vmem:[%s10] sm:$0x1]
    %v891 = vlaneseq
    %v892 = vshrl.u32 %v891, 7
    %v893 = vsub.s32 0, %v892
    %v894 = vrot.slane %v889, %v893
    %v897 = vsel %vm169, %v883, 0
    %v900 = vsel %vm169, %v884, 0
    %902 = vmatprep.subr.mxu0 0.0
    %903 = vmatpush1.msra.mxu0 %v885
    %904 = vmatprep.subr.mxu0 0.0
    %905 = vmatpush1.msra.mxu0 %v886
    %906 = vmatprep.subr.mxu0 0.0
    %907 = vmatpush1.msra.mxu0 %v887
    %908 = vmatprep.subr.mxu0 0.0
    %909 = vmatpush1.msra.mxu0 %v888
    %910 = vmatprep.subr.mxu0 0.0
    %911 = vmatpush1.msra.mxu0 0.0
    %912 = vmatprep.subr.mxu0 0.0
    %913 = vmatpush1.msra.mxu0 0.0
    %914 = vmatprep.subr.mxu0 0.0
    %915 = vmatpush1.msra.mxu0 0.0
    %916 = vmatprep.subr.mxu0 0.0
    %917 = vmatpush1.msra.mxu0 0.0
    %918 = vmatprep.subr.mxu0 0.0
    %919 = vmatpush1.msra.mxu0 0.0
    %920 = vmatprep.subr.mxu0 0.0
    %921 = vmatpush1.msra.mxu0 0.0
    %922 = vmatprep.subr.mxu0 0.0
    %923 = vmatpush1.msra.mxu0 0.0
    %924 = vmatprep.subr.mxu0 0.0
    %925 = vmatpush1.msra.mxu0 0.0
    %926 = vmatprep.subr.mxu0 0.0
    %927 = vmatpush1.msra.mxu0 0.0
    %928 = vmatprep.subr.mxu0 0.0
    %929 = vmatpush1.msra.mxu0 0.0
    %930 = vmatprep.subr.mxu0 0.0
    %931 = vmatpush1.msra.mxu0 0.0
    %932 = vmatprep.subr.mxu0 0.0
    %933 = vmatpush1.msra.mxu0 0.0
    %934 = vmatprep.subr.mxu0 0.0
    %935 = vmatpush1.msra.mxu0 0.0
    %936 = vmatprep.subr.mxu0 0.0
    %937 = vmatpush1.msra.mxu0 0.0
    %938 = vmatprep.subr.mxu0 0.0
    %939 = vmatpush1.msra.mxu0 0.0
    %940 = vmatprep.subr.mxu0 0.0
    %941 = vmatpush1.msra.mxu0 0.0
    %942 = vmatprep.subr.mxu0 0.0
    %943 = vmatpush1.msra.mxu0 0.0
    %944 = vmatprep.subr.mxu0 0.0
    %945 = vmatpush1.msra.mxu0 0.0
    %946 = vmatprep.subr.mxu0 0.0
    %947 = vmatpush1.msra.mxu0 0.0
    %948 = vmatprep.subr.mxu0 0.0
    %949 = vmatpush1.msra.mxu0 0.0
    %950 = vmatprep.subr.mxu0 0.0
    %951 = vmatpush1.msra.mxu0 0.0
    %952 = vmatprep.subr.mxu0 0.0
    %953 = vmatpush1.msra.mxu0 0.0
    %954 = vmatprep.subr.mxu0 0.0
    %955 = vmatpush1.msra.mxu0 0.0
    %956 = vmatprep.subr.mxu0 0.0
    %957 = vmatpush1.msra.mxu0 0.0
    %958 = vmatprep.subr.mxu0 0.0
    %959 = vmatpush1.msra.mxu0 0.0
    %960 = vmatprep.subr.mxu0 0.0
    %961 = vmatpush1.msra.mxu0 0.0
    %962 = vmatprep.subr.mxu0 0.0
    %963 = vmatpush1.msra.mxu0 0.0
    %964 = vmatprep.subr.mxu0 0.0
    %965 = vmatpush1.msra.mxu0 0.0
    %966 = vmatprep.mubr.f32.mxu0 0.0
    %967 = vmatmul.mubr.f32.gmra.mrb[0].mxu0 %v897
    %v968 = vpop.f32.mrb[0].mxu0
    %v969 = vadd.f32 %v894, %v968
    %v970 = vpop.f32.mrb[0].mxu0
    %971 = vmatprep.mubr.f32.mxu0 0.0
    %972 = vmatmul.mubr.f32.gmra.mrb[0].mxu0 %v900
    %v973 = vpop.f32.mrb[0].mxu0
    %v974 = vadd.f32 %v894, %v973
    %v975 = vpop.f32.mrb[0].mxu0
    %976 = vdwg.mxu0
    %v977 = vmul.f32 %v969, %v969
    %v978 = vmul.f32 %v974, %v974
    %v979 = vmul.f32 %v969, %v977
    %v980 = vmul.f32 %v974, %v978
    %v981 = vmul.f32 %v979, 0.044715
    %v982 = vmul.f32 %v980, 0.044715
    %v983 = vadd.f32 %v969, %v981
    %v984 = vadd.f32 %v974, %v982
    %v985 = vmul.f32 %v983, 0.7978846
    %v986 = vmul.f32 %v984, 0.7978846
    %v987 = vtanh.pop %v985
    %v988 = vtanh.pop %v986
    %v989 = vadd.f32 %v987, 1.0
    %v990 = vadd.f32 %v988, 1.0
    %v991 = vmul.f32 %v989, 0.5
    %v992 = vmul.f32 %v990, 0.5
    %v993 = vmul.f32 %v969, %v991
    %v994 = vmul.f32 %v974, %v992
    %v995 = vld [vmem:[%s11] sm:$0xff]
    %v996 = vld [vmem:[%s11 + $0x8] sm:$0xff]
    %v997 = vld [vmem:[%s11 + $0x10] sm:$0xff]
    %v998 = vld [vmem:[%s11 + $0x18] sm:$0xff]
    %v999 = vld [vmem:[%s11 + $0x20] sm:$0xff]
    %v1000 = vld [vmem:[%s11 + $0x28] sm:$0xff]
    %v1001 = vld [vmem:[%s11 + $0x30] sm:$0xff]
    %v1002 = vld [vmem:[%s11 + $0x38] sm:$0xff]
    %v1003 = vld [vmem:[%s12] sm:$0x1]
    %v1005 = vlaneseq
    %v1006 = vshrl.u32 %v1005, 7
    %v1007 = vsub.s32 0, %v1006
    %v1008 = vrot.slane %v1003, %v1007
    %vm1010 = vcmask 523264
    %v1012 = vsel %vm1010, %v993, 0
    %v1015 = vsel %vm1010, %v994, 0
    %1017 = vmatprep.subr.mxu0 0.0
    %1018 = vmatpush1.msra.mxu0 %v995
    %1019 = vmatprep.subr.mxu0 0.0
    %1020 = vmatpush1.msra.mxu0 %v996
    %1021 = vmatprep.subr.mxu0 0.0
    %1022 = vmatpush1.msra.mxu0 %v997
    %1023 = vmatprep.subr.mxu0 0.0
    %1024 = vmatpush1.msra.mxu0 %v998
    %1025 = vmatprep.subr.mxu0 0.0
    %1026 = vmatpush1.msra.mxu0 %v999
    %1027 = vmatprep.subr.mxu0 0.0
    %1028 = vmatpush1.msra.mxu0 %v1000
    %1029 = vmatprep.subr.mxu0 0.0
    %1030 = vmatpush1.msra.mxu0 %v1001
    %1031 = vmatprep.subr.mxu0 0.0
    %1032 = vmatpush1.msra.mxu0 %v1002
    %1033 = vmatprep.subr.mxu0 0.0
    %1034 = vmatpush1.msra.mxu0 0.0
    %1035 = vmatprep.subr.mxu0 0.0
    %1036 = vmatpush1.msra.mxu0 0.0
    %1037 = vmatprep.subr.mxu0 0.0
    %1038 = vmatpush1.msra.mxu0 0.0
    %1039 = vmatprep.subr.mxu0 0.0
    %1040 = vmatpush1.msra.mxu0 0.0
    %1041 = vmatprep.subr.mxu0 0.0
    %1042 = vmatpush1.msra.mxu0 0.0
    %1043 = vmatprep.subr.mxu0 0.0
    %1044 = vmatpush1.msra.mxu0 0.0
    %1045 = vmatprep.subr.mxu0 0.0
    %1046 = vmatpush1.msra.mxu0 0.0
    %1047 = vmatprep.subr.mxu0 0.0
    %1048 = vmatpush1.msra.mxu0 0.0
    %1049 = vmatprep.subr.mxu0 0.0
    %1050 = vmatpush1.msra.mxu0 0.0
    %1051 = vmatprep.subr.mxu0 0.0
    %1052 = vmatpush1.msra.mxu0 0.0
    %1053 = vmatprep.subr.mxu0 0.0
    %1054 = vmatpush1.msra.mxu0 0.0
    %1055 = vmatprep.subr.mxu0 0.0
    %1056 = vmatpush1.msra.mxu0 0.0
    %1057 = vmatprep.subr.mxu0 0.0
    %1058 = vmatpush1.msra.mxu0 0.0
    %1059 = vmatprep.subr.mxu0 0.0
    %1060 = vmatpush1.msra.mxu0 0.0
    %1061 = vmatprep.subr.mxu0 0.0
    %1062 = vmatpush1.msra.mxu0 0.0
    %1063 = vmatprep.subr.mxu0 0.0
    %1064 = vmatpush1.msra.mxu0 0.0
    %1065 = vmatprep.subr.mxu0 0.0
    %1066 = vmatpush1.msra.mxu0 0.0
    %1067 = vmatprep.subr.mxu0 0.0
    %1068 = vmatpush1.msra.mxu0 0.0
    %1069 = vmatprep.subr.mxu0 0.0
    %1070 = vmatpush1.msra.mxu0 0.0
    %1071 = vmatprep.subr.mxu0 0.0
    %1072 = vmatpush1.msra.mxu0 0.0
    %1073 = vmatprep.subr.mxu0 0.0
    %1074 = vmatpush1.msra.mxu0 0.0
    %1075 = vmatprep.subr.mxu0 0.0
    %1076 = vmatpush1.msra.mxu0 0.0
    %1077 = vmatprep.subr.mxu0 0.0
    %1078 = vmatpush1.msra.mxu0 0.0
    %1079 = vmatprep.subr.mxu0 0.0
    %1080 = vmatpush1.msra.mxu0 0.0
    %1081 = vmatprep.mubr.f32.mxu0 0.0
    %1082 = vmatmul.mubr.f32.gmra.mrb[0].mxu0 %v1012
    %v1083 = vpop.f32.mrb[0].mxu0
    %v1084 = vadd.f32 %v1008, %v1083
    %v1085 = vpop.f32.mrb[0].mxu0
    %1086 = vmatprep.mubr.f32.mxu0 0.0
    %1087 = vmatmul.mubr.f32.gmra.mrb[0].mxu0 %v1015
    %v1088 = vpop.f32.mrb[0].mxu0
    %v1089 = vadd.f32 %v1008, %v1088
    %v1090 = vpop.f32.mrb[0].mxu0
    %1091 = vdwg.mxu0
    %v1092 = vadd.f32 %v883, %v1084
    %v1093 = vadd.f32 %v884, %v1089
    %v1094 = vld [vmem:[%s13] sm:$0x1]
    %v1095 = vld [vmem:[%s14] sm:$0x1]
    %v1096 = vsel %vm169, %v1092, 0.0
    %1097 = vadd.xlane.f32.xlu0 %v1096
    %v1098 = vpop.xlane.xlu0 %1097
    %v1099 = vsel %vm169, %v1093, 0.0
    %1100 = vadd.xlane.f32.xlu0 %v1099
    %v1101 = vpop.xlane.xlu0 %1100
    %v1102 = vmul.f32 %v1098, %v848
    %v1103 = vmul.f32 %v1101, %v848
    %v1104 = vsub.f32 %v1092, %v1102
    %v1105 = vsub.f32 %v1093, %v1103
    %v1106 = vmul.f32 %v1104, %v1104
    %v1107 = vmul.f32 %v1105, %v1105
    %v1108 = vsel %vm169, %v1106, 0.0
    %1109 = vadd.xlane.f32.xlu0 %v1108
    %v1110 = vpop.xlane.xlu0 %1109
    %v1111 = vsel %vm169, %v1107, 0.0
    %1112 = vadd.xlane.f32.xlu0 %v1111
    %v1113 = vpop.xlane.xlu0 %1112
    %v1114 = vmul.f32 %v1110, %v848
    %v1115 = vmul.f32 %v1113, %v848
    %v1116 = vadd.f32 %v1114, 1e-12
    %v1117 = vadd.f32 %v1115, 1e-12
    %v1118 = vrsqrt.pop %v1116
    %v1119 = vrsqrt.pop %v1117
    %v1120 = vmul.f32 %v1104, %v1118
    %v1121 = vmul.f32 %v1105, %v1119
    %v1123 = vlaneseq
    %v1124 = vshrl.u32 %v1123, 7
    %v1125 = vsub.s32 0, %v1124
    %v1126 = vrot.slane %v1094, %v1125
    %v1128 = vmul.f32 %v1120, %v1126
    %v1129 = vmul.f32 %v1121, %v1126
    %v1131 = vlaneseq
    %v1132 = vshrl.u32 %v1131, 7
    %v1133 = vsub.s32 0, %v1132
    %v1134 = vrot.slane %v1095, %v1133
    %v1136 = vadd.f32 %v1128, %v1134
    %v1137 = vadd.f32 %v1129, %v1134
    %v1138 = vld [vmem:[#allocation7] sm:$0x3]
    %v1140 = vsel %vm257, %v1138, 0
    %1142 = vmatprep.subr.mxu0 0.0
    %1143 = vmatpush1.msra.mxu0 %v1136
    %1144 = vmatprep.subr.mxu0 0.0
    %1145 = vmatpush1.msra.mxu0 %v1137
    %1146 = vmatprep.subr.mxu0 0.0
    %1147 = vmatpush1.msra.mxu0 0.0
    %1148 = vmatprep.subr.mxu0 0.0
    %1149 = vmatpush1.msra.mxu0 0.0
    %1150 = vmatprep.subr.mxu0 0.0
    %1151 = vmatpush1.msra.mxu0 0.0
    %1152 = vmatprep.subr.mxu0 0.0
    %1153 = vmatpush1.msra.mxu0 0.0
    %1154 = vmatprep.subr.mxu0 0.0
    %1155 = vmatpush1.msra.mxu0 0.0
    %1156 = vmatprep.subr.mxu0 0.0
    %1157 = vmatpush1.msra.mxu0 0.0
    %1158 = vmatprep.subr.mxu0 0.0
    %1159 = vmatpush1.msra.mxu0 0.0
    %1160 = vmatprep.subr.mxu0 0.0
    %1161 = vmatpush1.msra.mxu0 0.0
    %1162 = vmatprep.subr.mxu0 0.0
    %1163 = vmatpush1.msra.mxu0 0.0
    %1164 = vmatprep.subr.mxu0 0.0
    %1165 = vmatpush1.msra.mxu0 0.0
    %1166 = vmatprep.subr.mxu0 0.0
    %1167 = vmatpush1.msra.mxu0 0.0
    %1168 = vmatprep.subr.mxu0 0.0
    %1169 = vmatpush1.msra.mxu0 0.0
    %1170 = vmatprep.subr.mxu0 0.0
    %1171 = vmatpush1.msra.mxu0 0.0
    %1172 = vmatprep.subr.mxu0 0.0
    %1173 = vmatpush1.msra.mxu0 0.0
    %1174 = vmatprep.subr.mxu0 0.0
    %1175 = vmatpush1.msra.mxu0 0.0
    %1176 = vmatprep.subr.mxu0 0.0
    %1177 = vmatpush1.msra.mxu0 0.0
    %1178 = vmatprep.subr.mxu0 0.0
    %1179 = vmatpush1.msra.mxu0 0.0
    %1180 = vmatprep.subr.mxu0 0.0
    %1181 = vmatpush1.msra.mxu0 0.0
    %1182 = vmatprep.subr.mxu0 0.0
    %1183 = vmatpush1.msra.mxu0 0.0
    %1184 = vmatprep.subr.mxu0 0.0
    %1185 = vmatpush1.msra.mxu0 0.0
    %1186 = vmatprep.subr.mxu0 0.0
    %1187 = vmatpush1.msra.mxu0 0.0
    %1188 = vmatprep.subr.mxu0 0.0
    %1189 = vmatpush1.msra.mxu0 0.0
    %1190 = vmatprep.subr.mxu0 0.0
    %1191 = vmatpush1.msra.mxu0 0.0
    %1192 = vmatprep.subr.mxu0 0.0
    %1193 = vmatpush1.msra.mxu0 0.0
    %1194 = vmatprep.subr.mxu0 0.0
    %1195 = vmatpush1.msra.mxu0 0.0
    %1196 = vmatprep.subr.mxu0 0.0
    %1197 = vmatpush1.msra.mxu0 0.0
    %1198 = vmatprep.subr.mxu0 0.0
    %1199 = vmatpush1.msra.mxu0 0.0
    %1200 = vmatprep.subr.mxu0 0.0
    %1201 = vmatpush1.msra.mxu0 0.0
    %1202 = vmatprep.subr.mxu0 0.0
    %1203 = vmatpush1.msra.mxu0 0.0
    %1204 = vmatprep.subr.mxu0 0.0
    %1205 = vmatpush1.msra.mxu0 0.0
    %1206 = vmatprep.mubr.f32.mxu0 0.0
    %1207 = vmatmul.mubr.f32.gmra.mrb[0].mxu0 %v1140
    %v1208 = vpop.f32.mrb[0].mxu0
    %v1209 = vadd.f32 0.0, %v1208
    %v1210 = vpop.f32.mrb[0].mxu0
    %1211 = vdwg.mxu0
    %vm1212 = vcmask 254976
    %1213 = vst.msk [vmem:[#allocation15] sm:$0x3] %vm1212, %v1209
    %v1214 = vld [vmem:[%s15] sm:$0xff]
    %v1215 = vld [vmem:[%s15 + $0x8] sm:$0xff]
    %v1216 = vld [vmem:[%s15 + $0x10] sm:$0xff]
    %v1217 = vld [vmem:[%s15 + $0x18] sm:$0xff]
    %v1218 = vld [vmem:[%s16] sm:$0x1]
    %v1220 = vlaneseq
    %v1221 = vshrl.u32 %v1220, 7
    %v1222 = vsub.s32 0, %v1221
    %v1223 = vrot.slane %v1218, %v1222
    %v1226 = vsel %vm169, %v1209, 0
    %1228 = vmatprep.subr.mxu0 0.0
    %1229 = vmatpush1.msra.mxu0 %v1214
    %1230 = vmatprep.subr.mxu0 0.0
    %1231 = vmatpush1.msra.mxu0 %v1215
    %1232 = vmatprep.subr.mxu0 0.0
    %1233 = vmatpush1.msra.mxu0 %v1216
    %1234 = vmatprep.subr.mxu0 0.0
    %1235 = vmatpush1.msra.mxu0 %v1217
    %1236 = vmatprep.subr.mxu0 0.0
    %1237 = vmatpush1.msra.mxu0 0.0
    %1238 = vmatprep.subr.mxu0 0.0
    %1239 = vmatpush1.msra.mxu0 0.0
    %1240 = vmatprep.subr.mxu0 0.0
    %1241 = vmatpush1.msra.mxu0 0.0
    %1242 = vmatprep.subr.mxu0 0.0
    %1243 = vmatpush1.msra.mxu0 0.0
    %1244 = vmatprep.subr.mxu0 0.0
    %1245 = vmatpush1.msra.mxu0 0.0
    %1246 = vmatprep.subr.mxu0 0.0
    %1247 = vmatpush1.msra.mxu0 0.0
    %1248 = vmatprep.subr.mxu0 0.0
    %1249 = vmatpush1.msra.mxu0 0.0
    %1250 = vmatprep.subr.mxu0 0.0
    %1251 = vmatpush1.msra.mxu0 0.0
    %1252 = vmatprep.subr.mxu0 0.0
    %1253 = vmatpush1.msra.mxu0 0.0
    %1254 = vmatprep.subr.mxu0 0.0
    %1255 = vmatpush1.msra.mxu0 0.0
    %1256 = vmatprep.subr.mxu0 0.0
    %1257 = vmatpush1.msra.mxu0 0.0
    %1258 = vmatprep.subr.mxu0 0.0
    %1259 = vmatpush1.msra.mxu0 0.0
    %1260 = vmatprep.subr.mxu0 0.0
    %1261 = vmatpush1.msra.mxu0 0.0
    %1262 = vmatprep.subr.mxu0 0.0
    %1263 = vmatpush1.msra.mxu0 0.0
    %1264 = vmatprep.subr.mxu0 0.0
    %1265 = vmatpush1.msra.mxu0 0.0
    %1266 = vmatprep.subr.mxu0 0.0
    %1267 = vmatpush1.msra.mxu0 0.0
    %1268 = vmatprep.subr.mxu0 0.0
    %1269 = vmatpush1.msra.mxu0 0.0
    %1270 = vmatprep.subr.mxu0 0.0
    %1271 = vmatpush1.msra.mxu0 0.0
    %1272 = vmatprep.subr.mxu0 0.0
    %1273 = vmatpush1.msra.mxu0 0.0
    %1274 = vmatprep.subr.mxu0 0.0
    %1275 = vmatpush1.msra.mxu0 0.0
    %1276 = vmatprep.subr.mxu0 0.0
    %1277 = vmatpush1.msra.mxu0 0.0
    %1278 = vmatprep.subr.mxu0 0.0
    %1279 = vmatpush1.msra.mxu0 0.0
    %1280 = vmatprep.subr.mxu0 0.0
    %1281 = vmatpush1.msra.mxu0 0.0
    %1282 = vmatprep.subr.mxu0 0.0
    %1283 = vmatpush1.msra.mxu0 0.0
    %1284 = vmatprep.subr.mxu0 0.0
    %1285 = vmatpush1.msra.mxu0 0.0
    %1286 = vmatprep.subr.mxu0 0.0
    %1287 = vmatpush1.msra.mxu0 0.0
    %1288 = vmatprep.subr.mxu0 0.0
    %1289 = vmatpush1.msra.mxu0 0.0
    %1290 = vmatprep.subr.mxu0 0.0
    %1291 = vmatpush1.msra.mxu0 0.0
    %1292 = vmatprep.mubr.f32.mxu0 0.0
    %1293 = vmatmul.mubr.f32.gmra.mrb[0].mxu0 %v1226
    %v1294 = vpop.f32.mrb[0].mxu0
    %v1295 = vadd.f32 %v1223, %v1294
    %v1296 = vpop.f32.mrb[0].mxu0
    %1297 = vdwg.mxu0
    %v1298 = vtanh.pop %v1295
    %v1299 = vld [vmem:[%s17] sm:$0xff]
    %v1300 = vld [vmem:[%s17 + $0x8] sm:$0xff]
    %v1301 = vld [vmem:[%s17 + $0x10] sm:$0xff]
    %v1302 = vld [vmem:[%s17 + $0x18] sm:$0xff]
    %v1303 = vld [vmem:[%s18] sm:$0x1]
    %v1305 = vlaneseq
    %v1306 = vshrl.u32 %v1305, 7
    %v1307 = vsub.s32 0, %v1306
    %v1308 = vrot.slane %v1303, %v1307
    %v1311 = vsel %vm169, %v1298, 0
    %1313 = vmatprep.subr.mxu0 0.0
    %1314 = vmatpush1.msra.mxu0 %v1299
    %1315 = vmatprep.subr.mxu0 0.0
    %1316 = vmatpush1.msra.mxu0 %v1300
    %1317 = vmatprep.subr.mxu0 0.0
    %1318 = vmatpush1.msra.mxu0 %v1301
    %1319 = vmatprep.subr.mxu0 0.0
    %1320 = vmatpush1.msra.mxu0 %v1302
    %1321 = vmatprep.subr.mxu0 0.0
    %1322 = vmatpush1.msra.mxu0 0.0
    %1323 = vmatprep.subr.mxu0 0.0
    %1324 = vmatpush1.msra.mxu0 0.0
    %1325 = vmatprep.subr.mxu0 0.0
    %1326 = vmatpush1.msra.mxu0 0.0
    %1327 = vmatprep.subr.mxu0 0.0
    %1328 = vmatpush1.msra.mxu0 0.0
    %1329 = vmatprep.subr.mxu0 0.0
    %1330 = vmatpush1.msra.mxu0 0.0
    %1331 = vmatprep.subr.mxu0 0.0
    %1332 = vmatpush1.msra.mxu0 0.0
    %1333 = vmatprep.subr.mxu0 0.0
    %1334 = vmatpush1.msra.mxu0 0.0
    %1335 = vmatprep.subr.mxu0 0.0
    %1336 = vmatpush1.msra.mxu0 0.0
    %1337 = vmatprep.subr.mxu0 0.0
    %1338 = vmatpush1.msra.mxu0 0.0
    %1339 = vmatprep.subr.mxu0 0.0
    %1340 = vmatpush1.msra.mxu0 0.0
    %1341 = vmatprep.subr.mxu0 0.0
    %1342 = vmatpush1.msra.mxu0 0.0
    %1343 = vmatprep.subr.mxu0 0.0
    %1344 = vmatpush1.msra.mxu0 0.0
    %1345 = vmatprep.subr.mxu0 0.0
    %1346 = vmatpush1.msra.mxu0 0.0
    %1347 = vmatprep.subr.mxu0 0.0
    %1348 = vmatpush1.msra.mxu0 0.0
    %1349 = vmatprep.subr.mxu0 0.0
    %1350 = vmatpush1.msra.mxu0 0.0
    %1351 = vmatprep.subr.mxu0 0.0
    %1352 = vmatpush1.msra.mxu0 0.0
    %1353 = vmatprep.subr.mxu0 0.0
    %1354 = vmatpush1.msra.mxu0 0.0
    %1355 = vmatprep.subr.mxu0 0.0
    %1356 = vmatpush1.msra.mxu0 0.0
    %1357 = vmatprep.subr.mxu0 0.0
    %1358 = vmatpush1.msra.mxu0 0.0
    %1359 = vmatprep.subr.mxu0 0.0
    %1360 = vmatpush1.msra.mxu0 0.0
    %1361 = vmatprep.subr.mxu0 0.0
    %1362 = vmatpush1.msra.mxu0 0.0
    %1363 = vmatprep.subr.mxu0 0.0
    %1364 = vmatpush1.msra.mxu0 0.0
    %1365 = vmatprep.subr.mxu0 0.0
    %1366 = vmatpush1.msra.mxu0 0.0
    %1367 = vmatprep.subr.mxu0 0.0
    %1368 = vmatpush1.msra.mxu0 0.0
    %1369 = vmatprep.subr.mxu0 0.0
    %1370 = vmatpush1.msra.mxu0 0.0
    %1371 = vmatprep.subr.mxu0 0.0
    %1372 = vmatpush1.msra.mxu0 0.0
    %1373 = vmatprep.subr.mxu0 0.0
    %1374 = vmatpush1.msra.mxu0 0.0
    %1375 = vmatprep.subr.mxu0 0.0
    %1376 = vmatpush1.msra.mxu0 0.0
    %1377 = vmatprep.mubr.f32.mxu0 0.0
    %1378 = vmatmul.mubr.f32.gmra.mrb[0].mxu0 %v1311
    %v1379 = vpop.f32.mrb[0].mxu0
    %v1380 = vadd.f32 %v1308, %v1379
    %v1381 = vpop.f32.mrb[0].mxu0
    %1382 = vdwg.mxu0
    %vm1383 = vcmask 9216
    %1384 = vst.msk [vmem:[#allocation17] sm:$0x3] %vm1383, %v1380
    %v1385 = vsel %vm1383, %v1380, -inf
    %1386 = vmax.xlane.f32.xlu0 %v1385
    %v1387 = vpop.xlane.xlu0 %1386
    %v1388 = vsub.f32 %v1380, %v1387
    %v1389 = vmul.f32 %v1388, 1.442695
    %v1390 = vpow.pop %v1389
    %v1391 = vsel %vm1383, %v1390, 0.0
    %1392 = vadd.xlane.f32.xlu0 %v1391
    %v1393 = vpop.xlane.xlu0 %1392
    %v1394 = vrcp.pop %v1393
    %v1395 = vmul.f32 %v1390, %v1394
    %1396 = vst.msk [vmem:[#allocation18] sm:$0x3] %vm1383, %v1395
    // Predicated region
    $region106: #{tpu_custom_call.1} parent=1 // pred_check
      _
    $region107: #{tpu_custom_call.1} parent=1 // pred_check_branch
      %1398 = sbr.rel (0) target = $region109
    $region108: #{tpu_custom_call.1} parent=1 // pred_region
      %s1400 = ssub.s32 512, 512
      %1401 = vsyncadd [#allocation4], %s1400
      %s1402 = sshll.u32 [#allocation14], 4
      %s1403 = int_to_ptr.vmem [resolvable:$true] %s1402
      %1408 = dma.vmem_to_hbm [thread:$0]  %s1403, 512, %s19, [#allocation4], 128, 128, 8
    $region109: #{tpu_custom_call.1} parent=1 // pred_fallthru
      _
    // Predicated region
    $region110: #{tpu_custom_call.1} parent=1 // pred_check
      _
    $region111: #{tpu_custom_call.1} parent=1 // pred_check_branch
      %1410 = sbr.rel (0) target = $region113
    $region112: #{tpu_custom_call.1} parent=1 // pred_region
      %s1412 = ssub.s32 32, 32
      %1413 = vsyncadd [#allocation16], %s1412
      %s1415 = sshll.u32 [#allocation15], 4
      %s1416 = int_to_ptr.vmem [resolvable:$true] %s1415
      %1418 = dma.vmem_to_hbm [thread:$0]  %s1416, 32, %s20, [#allocation16]
    $region113: #{tpu_custom_call.1} parent=1 // pred_fallthru
      _
    // Predicated region
    $region114: #{tpu_custom_call.1} parent=1 // pred_check
      _
    $region115: #{tpu_custom_call.1} parent=1 // pred_check_branch
      %1420 = sbr.rel (0) target = $region117
    $region116: #{tpu_custom_call.1} parent=1 // pred_region
      %s1422 = ssub.s32 32, 32
      %1423 = vsyncadd [#allocation16], %s1422
      %s1425 = sshll.u32 [#allocation17], 4
      %s1426 = int_to_ptr.vmem [resolvable:$true] %s1425
      %1428 = dma.vmem_to_hbm [thread:$0]  %s1426, 32, %s21, [#allocation16]
    $region117: #{tpu_custom_call.1} parent=1 // pred_fallthru
      _
    // Predicated region
    $region118: #{tpu_custom_call.1} parent=1 // pred_check
      _
    $region119: #{tpu_custom_call.1} parent=1 // pred_check_branch
      %1430 = sbr.rel (0) target = $region121
    $region120: #{tpu_custom_call.1} parent=1 // pred_region
      %s1432 = ssub.s32 32, 32
      %1433 = vsyncadd [#allocation19], %s1432
      %s1435 = sshll.u32 [#allocation18], 4
      %s1436 = int_to_ptr.vmem [resolvable:$true] %s1435
      %1438 = dma.vmem_to_hbm [thread:$0]  %s1436, 32, %s22, [#allocation19]
    $region121: #{tpu_custom_call.1} parent=1 // pred_fallthru
      _
    // Predicated region
    $region122: #{tpu_custom_call.1} parent=1 // pred_check
      _
    $region123: #{tpu_custom_call.1} parent=1 // pred_check_branch
      %1440 = sbr.rel (0) target = $region125
    $region124: #{tpu_custom_call.1} parent=1 // pred_region
      %1441 = dma.done [#allocation4], 512
    $region125: #{tpu_custom_call.1} parent=1 // pred_fallthru
      _
    // Predicated region
    $region126: #{tpu_custom_call.1} parent=1 // pred_check
      _
    $region127: #{tpu_custom_call.1} parent=1 // pred_check_branch
      %1443 = sbr.rel (0) target = $region129
    $region128: #{tpu_custom_call.1} parent=1 // pred_region
      %1444 = dma.done [#allocation16], 32
    $region129: #{tpu_custom_call.1} parent=1 // pred_fallthru
      _
    // Predicated region
    $region130: #{tpu_custom_call.1} parent=1 // pred_check
      _
    $region131: #{tpu_custom_call.1} parent=1 // pred_check_branch
      %1446 = sbr.rel (0) target = $region133
    $region132: #{tpu_custom_call.1} parent=1 // pred_region
      %1447 = dma.done [#allocation16], 32
    $region133: #{tpu_custom_call.1} parent=1 // pred_fallthru
      _
    // Predicated region
    $region134: #{tpu_custom_call.1} parent=1 // pred_check
      _
    $region135: #{tpu_custom_call.1} parent=1 // pred_check_branch
      %1449 = sbr.rel (0) target = $region137
    $region136: #{tpu_custom_call.1} parent=1 // pred_region
      %1450 = dma.done [#allocation19], 32
    $region137: #{tpu_custom_call.1} parent=1 // pred_fallthru
      _
    %1451 = vsyncpa [#allocation3], 1
    %1452 = vsyncpa [#allocation6], 1
    %1453 = vsyncpa [#allocation9], 1
    %1454 = vsyncpa [#allocation12], 1
    %1455 = vsyncpa [#allocation4], 1
    %1456 = vsyncpa [#allocation16], 1
    %1457 = vsyncpa [#allocation19], 1

</llo_original>
